<compile_context>
chip_gen: v5e
topology: v5e:2x2
jax: 0.10.0
libtpu: 0.0.40
codegen_flags: <defaults>
</compile_context>

<pallas_src>
import math
from functools import partial

import jax
import jax.numpy as jnp
from jax.experimental import pallas as pl
from jax.experimental.pallas import tpu as pltpu

LN_EPS = 1e-5
LANES = 128


# ------------------------------ kernel helpers -------------------------------

def _layer_norm(x, gamma, beta):
    mean = jnp.mean(x, axis=-1, keepdims=True)
    var = jnp.mean((x - mean) ** 2, axis=-1, keepdims=True)
    return (x - mean) * jax.lax.rsqrt(var + LN_EPS) * gamma + beta


def _mha_heads(q, k, v, n_heads):
    """Scaled dot-product attention with heads batched on a leading axis."""
    Sq, kdim = q.shape
    Sk, vdim = v.shape
    dk = kdim // n_heads
    dv = vdim // n_heads
    scale = 1.0 / math.sqrt(dk)
    # heads -> leading (batch) axis; slices are static, stacked once.
    qh = jnp.stack([q[:, h * dk:(h + 1) * dk] for h in range(n_heads)], axis=0)  # (H,Sq,dk)
    kh = jnp.stack([k[:, h * dk:(h + 1) * dk] for h in range(n_heads)], axis=0)  # (H,Sk,dk)
    vh = jnp.stack([v[:, h * dv:(h + 1) * dv] for h in range(n_heads)], axis=0)  # (H,Sk,dv)
    # contraction on the last axis of BOTH operands -> no explicit K transpose.
    s = jnp.einsum('hqd,hkd->hqk', qh, kh,
                   preferred_element_type=jnp.float32) * scale                   # (H,Sq,Sk)
    s = s - jnp.max(s, axis=-1, keepdims=True)
    p = jnp.exp(s)
    p = p / jnp.sum(p, axis=-1, keepdims=True)
    ctx = jnp.einsum('hqk,hkd->hqd', p, vh,
                     preferred_element_type=jnp.float32)                          # (H,Sq,dv)
    return jnp.concatenate([ctx[h] for h in range(n_heads)], axis=-1)             # (Sq,vdim)


# ------------------------------ fused kernel ---------------------------------

def decoder_layer_kernel(n_heads, kdim, vdim,
                         tgt_ref, mem_ref,
                         wqkv0, bqkv0, wo0, bo0, g0, be0,
                         wq1, bq1, wkv1, bkv1, wo1, bo1, g1, be1,
                         w1, b1, w2, b2, g2, be2,
                         o_ref):
    """One batch element: whole decoder layer, activations kept in VMEM/vregs."""
    x0 = tgt_ref[0]      # (Sq, vdim)
    mem = mem_ref[0]     # (Sk, vdim)

    # ---------------- self-attention (fused, lane-padded QKV projection) -----
    qkv = jnp.dot(x0, wqkv0[...], preferred_element_type=jnp.float32) + bqkv0[...]
    q = qkv[:, :kdim]
    k = qkv[:, kdim:2 * kdim]
    v = qkv[:, 2 * kdim:2 * kdim + vdim]
    ctx = _mha_heads(q, k, v, n_heads)
    attn = jnp.dot(ctx, wo0[...], preferred_element_type=jnp.float32) + bo0[...]
    x1 = _layer_norm(attn + x0, g0[...], be0[...])

    # ---------------- cross-attention (fused, lane-padded KV projection) -----
    q1 = jnp.dot(x1, wq1[...], preferred_element_type=jnp.float32) + bq1[...]
    kv = jnp.dot(mem, wkv1[...], preferred_element_type=jnp.float32) + bkv1[...]
    k1 = kv[:, :kdim]
    v1 = kv[:, kdim:kdim + vdim]
    ctx1 = _mha_heads(q1, k1, v1, n_heads)
    attn1 = jnp.dot(ctx1, wo1[...], preferred_element_type=jnp.float32) + bo1[...]
    x2 = _layer_norm(attn1 + x1, g1[...], be1[...])

    # ---------------- FFN (hidden zero-padded to 128 lanes) ------------------
    h = jnp.maximum(jnp.dot(x2, w1[...], preferred_element_type=jnp.float32) + b1[...], 0.0)
    y = jnp.dot(h, w2[...], preferred_element_type=jnp.float32) + b2[...]
    o_ref[0] = _layer_norm(y + x2, g2[...], be2[...]).astype(o_ref.dtype)


# --------------------------------- wrapper ------------------------------------

def _wspec(shape):
    # full (untiled) weight block, resident across every grid step
    return pl.BlockSpec(shape, lambda b: (0,) * len(shape))


def _pad_lanes(w, b):
    """Zero-pad the output (lane) dim of a linear layer to a multiple of 128."""
    n = w.shape[1]
    target = -(-n // LANES) * LANES
    if target != n:
        w = jnp.pad(w, ((0, 0), (0, target - n)))
        b = jnp.pad(b, ((0, 0), (0, target - n)))
    return w, b


@partial(jax.jit, static_argnames=("n_heads",))
def transformer_decoder_layer(tgt, memory, params, n_heads):
    B, Sq, vdim = tgt.shape
    Sk = memory.shape[1]
    a0, a1, ffn = params['attn_0'], params['attn_1'], params['ffn']
    kdim = a0['wq'].shape[1]

    # ----- fused / lane-padded weight packing (numerically inert padding) -----
    wqkv0 = jnp.concatenate([a0['wq'], a0['wk'], a0['wv']], axis=1)
    bqkv0 = jnp.concatenate([a0['bq'], a0['bk'], a0['bv']], axis=1)
    wqkv0, bqkv0 = _pad_lanes(wqkv0, bqkv0)

    wkv1 = jnp.concatenate([a1['wk'], a1['wv']], axis=1)
    bkv1 = jnp.concatenate([a1['bk'], a1['bv']], axis=1)
    wkv1, bkv1 = _pad_lanes(wkv1, bkv1)

    w1, b1 = _pad_lanes(ffn['w1'], ffn['b1'])
    hidden_pad = w1.shape[1]
    w2 = jnp.pad(ffn['w2'], ((0, hidden_pad - ffn['w2'].shape[0]), (0, 0)))

    args = (wqkv0, bqkv0, a0['wo'], a0['bo'],
            params['ln_0']['gamma'], params['ln_0']['beta'],
            a1['wq'], a1['bq'], wkv1, bkv1, a1['wo'], a1['bo'],
            params['ln_1']['gamma'], params['ln_1']['beta'],
            w1, b1, w2, ffn['b2'],
            params['ln_2']['gamma'], params['ln_2']['beta'])

    return pl.pallas_call(
        partial(decoder_layer_kernel, n_heads, kdim, vdim),
        out_shape=jax.ShapeDtypeStruct((B, Sq, vdim), tgt.dtype),
        grid=(B,),
        in_specs=[pl.BlockSpec((1, Sq, vdim), lambda b: (b, 0, 0)),
                  pl.BlockSpec((1, Sk, vdim), lambda b: (b, 0, 0))]
                 + [_wspec(a.shape) for a in args],
        out_specs=pl.BlockSpec((1, Sq, vdim), lambda b: (b, 0, 0)),
        compiler_params=pltpu.CompilerParams(dimension_semantics=("parallel",)),
    )(tgt, memory, *args)


# ----------------------- parameter initialization ---------------------------

def _linear_init(key, fan_in, fan_out):
    k1, k2 = jax.random.split(key)
    bound = 1.0 / math.sqrt(fan_in)
    w = jax.random.uniform(k1, (fan_in, fan_out), jnp.float32, -bound, bound)
    b = jax.random.uniform(k2, (1, fan_out), jnp.float32, -bound, bound)
    return w, b


def init_params(key, kdim, vdim, forward_expansion=2):
    keys = jax.random.split(key, 4)

    def mha_params(k4):
        ks = jax.random.split(k4, 4)
        wq, bq = _linear_init(ks[0], vdim, kdim)
        wk, bk = _linear_init(ks[1], vdim, kdim)
        wv, bv = _linear_init(ks[2], vdim, vdim)
        wo, bo = _linear_init(ks[3], vdim, vdim)
        return dict(wq=wq, bq=bq, wk=wk, bk=bk, wv=wv, bv=bv, wo=wo, bo=bo)

    def ln_params():
        return dict(gamma=jnp.ones((1, vdim), jnp.float32),
                    beta=jnp.zeros((1, vdim), jnp.float32))

    hidden = forward_expansion * vdim
    w1, b1 = _linear_init(keys[2], vdim, hidden)
    w2, b2 = _linear_init(keys[3], hidden, vdim)

    return dict(
        attn_0=mha_params(keys[0]), ln_0=ln_params(),
        attn_1=mha_params(keys[1]), ln_1=ln_params(),
        ffn=dict(w1=w1, b1=b1, w2=w2, b2=b2), ln_2=ln_params(),
    )


# ---------------------------- pure-JAX reference -----------------------------

def _ref_mha(q_in, kv_in, p, n_heads):
    q = q_in @ p['wq'] + p['bq']
    k = kv_in @ p['wk'] + p['bk']
    v = kv_in @ p['wv'] + p['bv']
    B, Sq, kdim = q.shape
    Sk = k.shape[1]
    vdim = v.shape[2]
    dk, dv = kdim // n_heads, vdim // n_heads
    qh = q.reshape(B, Sq, n_heads, dk)
    kh = k.reshape(B, Sk, n_heads, dk)
    vh = v.reshape(B, Sk, n_heads, dv)
    s = jnp.einsum('bqhd,bkhd->bhqk', qh, kh) / math.sqrt(dk)
    p_attn = jax.nn.softmax(s, axis=-1)
    ctx = jnp.einsum('bhqk,bkhd->bqhd', p_attn, vh).reshape(B, Sq, vdim)
    return ctx @ p['wo'] + p['bo']


def _ref_forward(tgt, memory, params, n_heads):
    def ln(x, lp):
        m = jnp.mean(x, -1, keepdims=True)
        v = jnp.mean((x - m) ** 2, -1, keepdims=True)
        return (x - m) * jax.lax.rsqrt(v + LN_EPS) * lp['gamma'] + lp['beta']
    x = ln(_ref_mha(tgt, tgt, params['attn_0'], n_heads) + tgt, params['ln_0'])
    x = ln(_ref_mha(x, memory, params['attn_1'], n_heads) + x, params['ln_1'])
    f = jnp.maximum(x @ params['ffn']['w1'] + params['ffn']['b1'], 0.0)
    f = f @ params['ffn']['w2'] + params['ffn']['b2']
    return ln(f + x, params['ln_2'])


# --------------------------------- main --------------------------------------

if __name__ == "__main__":
    kdim, vdim, n_heads = 32, 32, 4
    B, S_tgt, S_mem = 2, 8, 16

    key = jax.random.PRNGKey(0)
    k_tgt, k_mem, k_par = jax.random.split(key, 3)
    tgt = jax.random.normal(k_tgt, (B, S_tgt, vdim), jnp.float32)
    memory = jax.random.normal(k_mem, (B, S_mem, vdim), jnp.float32)
    params = init_params(k_par, kdim, vdim, forward_expansion=2)

    out = transformer_decoder_layer(tgt, memory, params, n_heads=n_heads)
    out = jax.block_until_ready(out)

    ref = _ref_forward(tgt, memory, params, n_heads)
    assert out.shape == (B, S_tgt, vdim)
    assert jnp.allclose(out, ref, atol=1e-4, rtol=1e-4), "mismatch vs pure-JAX reference"

    print("KERNEL_OK")
</pallas_src>

<mosaic_0001>
module attributes {stable_mosaic.version = 11 : i64} {
  func.func @decoder_layer_kernel(%arg0: i32, %arg1: memref<1x8x32xf32, #tpu.memory_space<vmem>>, %arg2: memref<1x16x32xf32, #tpu.memory_space<vmem>>, %arg3: memref<32x128xf32, #tpu.memory_space<vmem>>, %arg4: memref<1x128xf32, #tpu.memory_space<vmem>>, %arg5: memref<32x32xf32, #tpu.memory_space<vmem>>, %arg6: memref<1x32xf32, #tpu.memory_space<vmem>>, %arg7: memref<1x32xf32, #tpu.memory_space<vmem>>, %arg8: memref<1x32xf32, #tpu.memory_space<vmem>>, %arg9: memref<32x32xf32, #tpu.memory_space<vmem>>, %arg10: memref<1x32xf32, #tpu.memory_space<vmem>>, %arg11: memref<32x128xf32, #tpu.memory_space<vmem>>, %arg12: memref<1x128xf32, #tpu.memory_space<vmem>>, %arg13: memref<32x32xf32, #tpu.memory_space<vmem>>, %arg14: memref<1x32xf32, #tpu.memory_space<vmem>>, %arg15: memref<1x32xf32, #tpu.memory_space<vmem>>, %arg16: memref<1x32xf32, #tpu.memory_space<vmem>>, %arg17: memref<32x128xf32, #tpu.memory_space<vmem>>, %arg18: memref<1x128xf32, #tpu.memory_space<vmem>>, %arg19: memref<128x32xf32, #tpu.memory_space<vmem>>, %arg20: memref<1x32xf32, #tpu.memory_space<vmem>>, %arg21: memref<1x32xf32, #tpu.memory_space<vmem>>, %arg22: memref<1x32xf32, #tpu.memory_space<vmem>>, %arg23: memref<1x8x32xf32, #tpu.memory_space<vmem>>) attributes {dimension_semantics = [#tpu.dimension_semantics<parallel>], iteration_bounds = array<i64: 2>, scalar_prefetch = 0 : i64, scratch_operands = 0 : i64, tpu.core_type = #tpu.core_type<tc>, window_params = [{transform_indices = @transform_0, window_bounds = array<i64: 1, 8, 32>}, {transform_indices = @transform_1, window_bounds = array<i64: 1, 16, 32>}, {pipeline_mode = #tpu.pipeline_mode<synchronous>, transform_indices = @transform_2, window_bounds = array<i64: 32, 128>}, {pipeline_mode = #tpu.pipeline_mode<synchronous>, transform_indices = @transform_3, window_bounds = array<i64: 1, 128>}, {pipeline_mode = #tpu.pipeline_mode<synchronous>, transform_indices = @transform_4, window_bounds = array<i64: 32, 32>}, {pipeline_mode = #tpu.pipeline_mode<synchronous>, transform_indices = @transform_5, window_bounds = array<i64: 1, 32>}, {pipeline_mode = #tpu.pipeline_mode<synchronous>, transform_indices = @transform_6, window_bounds = array<i64: 1, 32>}, {pipeline_mode = #tpu.pipeline_mode<synchronous>, transform_indices = @transform_7, window_bounds = array<i64: 1, 32>}, {pipeline_mode = #tpu.pipeline_mode<synchronous>, transform_indices = @transform_8, window_bounds = array<i64: 32, 32>}, {pipeline_mode = #tpu.pipeline_mode<synchronous>, transform_indices = @transform_9, window_bounds = array<i64: 1, 32>}, {pipeline_mode = #tpu.pipeline_mode<synchronous>, transform_indices = @transform_10, window_bounds = array<i64: 32, 128>}, {pipeline_mode = #tpu.pipeline_mode<synchronous>, transform_indices = @transform_11, window_bounds = array<i64: 1, 128>}, {pipeline_mode = #tpu.pipeline_mode<synchronous>, transform_indices = @transform_12, window_bounds = array<i64: 32, 32>}, {pipeline_mode = #tpu.pipeline_mode<synchronous>, transform_indices = @transform_13, window_bounds = array<i64: 1, 32>}, {pipeline_mode = #tpu.pipeline_mode<synchronous>, transform_indices = @transform_14, window_bounds = array<i64: 1, 32>}, {pipeline_mode = #tpu.pipeline_mode<synchronous>, transform_indices = @transform_15, window_bounds = array<i64: 1, 32>}, {pipeline_mode = #tpu.pipeline_mode<synchronous>, transform_indices = @transform_16, window_bounds = array<i64: 32, 128>}, {pipeline_mode = #tpu.pipeline_mode<synchronous>, transform_indices = @transform_17, window_bounds = array<i64: 1, 128>}, {pipeline_mode = #tpu.pipeline_mode<synchronous>, transform_indices = @transform_18, window_bounds = array<i64: 128, 32>}, {pipeline_mode = #tpu.pipeline_mode<synchronous>, transform_indices = @transform_19, window_bounds = array<i64: 1, 32>}, {pipeline_mode = #tpu.pipeline_mode<synchronous>, transform_indices = @transform_20, window_bounds = array<i64: 1, 32>}, {pipeline_mode = #tpu.pipeline_mode<synchronous>, transform_indices = @transform_21, window_bounds = array<i64: 1, 32>}, {transform_indices = @transform_22, window_bounds = array<i64: 1, 8, 32>}]} {
    %c0 = arith.constant 0 : index
    %c0_0 = arith.constant 0 : index
    %c0_1 = arith.constant 0 : index
    %0 = vector.load %arg1[%c0, %c0_0, %c0_1] : memref<1x8x32xf32, #tpu.memory_space<vmem>>, vector<1x8x32xf32>
    %1 = vector.shape_cast %0 : vector<1x8x32xf32> to vector<8x32xf32>
    %c0_2 = arith.constant 0 : index
    %c0_3 = arith.constant 0 : index
    %c0_4 = arith.constant 0 : index
    %2 = vector.load %arg2[%c0_2, %c0_3, %c0_4] : memref<1x16x32xf32, #tpu.memory_space<vmem>>, vector<1x16x32xf32>
    %3 = vector.shape_cast %2 : vector<1x16x32xf32> to vector<16x32xf32>
    %c0_5 = arith.constant 0 : index
    %c0_6 = arith.constant 0 : index
    %4 = vector.load %arg3[%c0_5, %c0_6] : memref<32x128xf32, #tpu.memory_space<vmem>>, vector<32x128xf32>
    %cst = arith.constant dense<0.000000e+00> : vector<8x128xf32>
    %5 = tpu.matmul %1, %4, %cst {dimension_numbers = #tpu.dot_dimension_numbers<[1], [0], [0], [1], [0, 0, 1, 1], [], []>} : vector<8x32xf32>, vector<32x128xf32>, vector<8x128xf32> -> vector<8x128xf32>
    %c0_7 = arith.constant 0 : index
    %c0_8 = arith.constant 0 : index
    %6 = vector.load %arg4[%c0_7, %c0_8] : memref<1x128xf32, #tpu.memory_space<vmem>>, vector<1x128xf32>
    %7 = vector.broadcast %6 : vector<1x128xf32> to vector<8x128xf32>
    %8 = arith.addf %5, %7 : vector<8x128xf32>
    %9 = vector.extract_strided_slice %8 {offsets = [0, 0], sizes = [8, 32], strides = [1, 1]} : vector<8x128xf32> to vector<8x32xf32>
    %10 = vector.extract_strided_slice %8 {offsets = [0, 32], sizes = [8, 32], strides = [1, 1]} : vector<8x128xf32> to vector<8x32xf32>
    %11 = vector.extract_strided_slice %8 {offsets = [0, 64], sizes = [8, 32], strides = [1, 1]} : vector<8x128xf32> to vector<8x32xf32>
    %12 = vector.extract_strided_slice %9 {offsets = [0, 0], sizes = [8, 8], strides = [1, 1]} : vector<8x32xf32> to vector<8x8xf32>
    %13 = vector.extract_strided_slice %9 {offsets = [0, 8], sizes = [8, 8], strides = [1, 1]} : vector<8x32xf32> to vector<8x8xf32>
    %14 = vector.extract_strided_slice %9 {offsets = [0, 16], sizes = [8, 8], strides = [1, 1]} : vector<8x32xf32> to vector<8x8xf32>
    %15 = vector.extract_strided_slice %9 {offsets = [0, 24], sizes = [8, 8], strides = [1, 1]} : vector<8x32xf32> to vector<8x8xf32>
    %16 = vector.shape_cast %12 : vector<8x8xf32> to vector<1x8x8xf32>
    %17 = vector.shape_cast %13 : vector<8x8xf32> to vector<1x8x8xf32>
    %18 = vector.shape_cast %14 : vector<8x8xf32> to vector<1x8x8xf32>
    %19 = vector.shape_cast %15 : vector<8x8xf32> to vector<1x8x8xf32>
    %20 = tpu.concatenate %16, %17, %18, %19 in 0 : vector<1x8x8xf32>, vector<1x8x8xf32>, vector<1x8x8xf32>, vector<1x8x8xf32> -> vector<4x8x8xf32>
    %21 = vector.extract_strided_slice %10 {offsets = [0, 0], sizes = [8, 8], strides = [1, 1]} : vector<8x32xf32> to vector<8x8xf32>
    %22 = vector.extract_strided_slice %10 {offsets = [0, 8], sizes = [8, 8], strides = [1, 1]} : vector<8x32xf32> to vector<8x8xf32>
    %23 = vector.extract_strided_slice %10 {offsets = [0, 16], sizes = [8, 8], strides = [1, 1]} : vector<8x32xf32> to vector<8x8xf32>
    %24 = vector.extract_strided_slice %10 {offsets = [0, 24], sizes = [8, 8], strides = [1, 1]} : vector<8x32xf32> to vector<8x8xf32>
    %25 = vector.shape_cast %21 : vector<8x8xf32> to vector<1x8x8xf32>
    %26 = vector.shape_cast %22 : vector<8x8xf32> to vector<1x8x8xf32>
    %27 = vector.shape_cast %23 : vector<8x8xf32> to vector<1x8x8xf32>
    %28 = vector.shape_cast %24 : vector<8x8xf32> to vector<1x8x8xf32>
    %29 = tpu.concatenate %25, %26, %27, %28 in 0 : vector<1x8x8xf32>, vector<1x8x8xf32>, vector<1x8x8xf32>, vector<1x8x8xf32> -> vector<4x8x8xf32>
    %30 = vector.extract_strided_slice %11 {offsets = [0, 0], sizes = [8, 8], strides = [1, 1]} : vector<8x32xf32> to vector<8x8xf32>
    %31 = vector.extract_strided_slice %11 {offsets = [0, 8], sizes = [8, 8], strides = [1, 1]} : vector<8x32xf32> to vector<8x8xf32>
    %32 = vector.extract_strided_slice %11 {offsets = [0, 16], sizes = [8, 8], strides = [1, 1]} : vector<8x32xf32> to vector<8x8xf32>
    %33 = vector.extract_strided_slice %11 {offsets = [0, 24], sizes = [8, 8], strides = [1, 1]} : vector<8x32xf32> to vector<8x8xf32>
    %34 = vector.shape_cast %30 : vector<8x8xf32> to vector<1x8x8xf32>
    %35 = vector.shape_cast %31 : vector<8x8xf32> to vector<1x8x8xf32>
    %36 = vector.shape_cast %32 : vector<8x8xf32> to vector<1x8x8xf32>
    %37 = vector.shape_cast %33 : vector<8x8xf32> to vector<1x8x8xf32>
    %38 = tpu.concatenate %34, %35, %36, %37 in 0 : vector<1x8x8xf32>, vector<1x8x8xf32>, vector<1x8x8xf32>, vector<1x8x8xf32> -> vector<4x8x8xf32>
    "tpu.trace_start"() <{level = 10 : i32, message = "hqd,hkd->hqk"}> : () -> ()
    %cst_9 = arith.constant dense<0.000000e+00> : vector<4x8x8xf32>
    %39 = tpu.matmul %20, %29, %cst_9 {dimension_numbers = #tpu.dot_dimension_numbers<[2], [2], [1], [1], [0, 0, 0, 1, 1, 1], [0], [0]>} : vector<4x8x8xf32>, vector<4x8x8xf32>, vector<4x8x8xf32> -> vector<4x8x8xf32>
    "tpu.trace_stop"() : () -> ()
    %cst_10 = arith.constant 0.353553385 : f32
    %40 = vector.broadcast %cst_10 : f32 to vector<4x8x8xf32>
    %41 = arith.mulf %39, %40 : vector<4x8x8xf32>
    %cst_11 = arith.constant dense<0xFF800000> : vector<4x8xf32>
    %42 = vector.multi_reduction <maximumf>, %41, %cst_11 [2] : vector<4x8x8xf32> to vector<4x8xf32>
    %43 = vector.shape_cast %42 : vector<4x8xf32> to vector<4x8x1xf32>
    %44 = vector.broadcast %43 : vector<4x8x1xf32> to vector<4x8x8xf32>
    %45 = arith.subf %41, %44 : vector<4x8x8xf32>
    %46 = math.exp %45 : vector<4x8x8xf32>
    %cst_12 = arith.constant dense<0.000000e+00> : vector<4x8xf32>
    %47 = vector.multi_reduction <add>, %46, %cst_12 [2] : vector<4x8x8xf32> to vector<4x8xf32>
    %48 = vector.shape_cast %47 : vector<4x8xf32> to vector<4x8x1xf32>
    %49 = vector.broadcast %48 : vector<4x8x1xf32> to vector<4x8x8xf32>
    %50 = arith.divf %46, %49 : vector<4x8x8xf32>
    "tpu.trace_start"() <{level = 10 : i32, message = "hqk,hkd->hqd"}> : () -> ()
    %cst_13 = arith.constant dense<0.000000e+00> : vector<4x8x8xf32>
    %51 = tpu.matmul %50, %38, %cst_13 {dimension_numbers = #tpu.dot_dimension_numbers<[2], [1], [1], [2], [0, 0, 0, 1, 1, 2], [0], [0]>} : vector<4x8x8xf32>, vector<4x8x8xf32>, vector<4x8x8xf32> -> vector<4x8x8xf32>
    "tpu.trace_stop"() : () -> ()
    %52 = vector.extract_strided_slice %51 {offsets = [0, 0, 0], sizes = [1, 8, 8], strides = [1, 1, 1]} : vector<4x8x8xf32> to vector<1x8x8xf32>
    %53 = vector.shape_cast %52 : vector<1x8x8xf32> to vector<8x8xf32>
    %54 = vector.extract_strided_slice %51 {offsets = [1, 0, 0], sizes = [1, 8, 8], strides = [1, 1, 1]} : vector<4x8x8xf32> to vector<1x8x8xf32>
    %55 = vector.shape_cast %54 : vector<1x8x8xf32> to vector<8x8xf32>
    %56 = vector.extract_strided_slice %51 {offsets = [2, 0, 0], sizes = [1, 8, 8], strides = [1, 1, 1]} : vector<4x8x8xf32> to vector<1x8x8xf32>
    %57 = vector.shape_cast %56 : vector<1x8x8xf32> to vector<8x8xf32>
    %58 = vector.extract_strided_slice %51 {offsets = [3, 0, 0], sizes = [1, 8, 8], strides = [1, 1, 1]} : vector<4x8x8xf32> to vector<1x8x8xf32>
    %59 = vector.shape_cast %58 : vector<1x8x8xf32> to vector<8x8xf32>
    %60 = tpu.concatenate %53, %55, %57, %59 in 1 : vector<8x8xf32>, vector<8x8xf32>, vector<8x8xf32>, vector<8x8xf32> -> vector<8x32xf32>
    %c0_14 = arith.constant 0 : index
    %c0_15 = arith.constant 0 : index
    %61 = vector.load %arg5[%c0_14, %c0_15] : memref<32x32xf32, #tpu.memory_space<vmem>>, vector<32x32xf32>
    %cst_16 = arith.constant dense<0.000000e+00> : vector<8x32xf32>
    %62 = tpu.matmul %60, %61, %cst_16 {dimension_numbers = #tpu.dot_dimension_numbers<[1], [0], [0], [1], [0, 0, 1, 1], [], []>} : vector<8x32xf32>, vector<32x32xf32>, vector<8x32xf32> -> vector<8x32xf32>
    %c0_17 = arith.constant 0 : index
    %c0_18 = arith.constant 0 : index
    %63 = vector.load %arg6[%c0_17, %c0_18] : memref<1x32xf32, #tpu.memory_space<vmem>>, vector<1x32xf32>
    %64 = vector.broadcast %63 : vector<1x32xf32> to vector<8x32xf32>
    %65 = arith.addf %62, %64 : vector<8x32xf32>
    %66 = arith.addf %65, %1 : vector<8x32xf32>
    %c0_19 = arith.constant 0 : index
    %c0_20 = arith.constant 0 : index
    %67 = vector.load %arg7[%c0_19, %c0_20] : memref<1x32xf32, #tpu.memory_space<vmem>>, vector<1x32xf32>
    %c0_21 = arith.constant 0 : index
    %c0_22 = arith.constant 0 : index
    %68 = vector.load %arg8[%c0_21, %c0_22] : memref<1x32xf32, #tpu.memory_space<vmem>>, vector<1x32xf32>
    %cst_23 = arith.constant dense<0.000000e+00> : vector<8xf32>
    %69 = vector.multi_reduction <add>, %66, %cst_23 [1] : vector<8x32xf32> to vector<8xf32>
    %70 = vector.shape_cast %69 : vector<8xf32> to vector<8x1xf32>
    %cst_24 = arith.constant 3.200000e+01 : f32
    %71 = vector.broadcast %cst_24 : f32 to vector<8x1xf32>
    %72 = arith.divf %70, %71 : vector<8x1xf32>
    %73 = vector.broadcast %72 : vector<8x1xf32> to vector<8x32xf32>
    %74 = arith.subf %66, %73 : vector<8x32xf32>
    %75 = arith.mulf %74, %74 : vector<8x32xf32>
    %cst_25 = arith.constant dense<0.000000e+00> : vector<8xf32>
    %76 = vector.multi_reduction <add>, %75, %cst_25 [1] : vector<8x32xf32> to vector<8xf32>
    %77 = vector.shape_cast %76 : vector<8xf32> to vector<8x1xf32>
    %cst_26 = arith.constant 3.200000e+01 : f32
    %78 = vector.broadcast %cst_26 : f32 to vector<8x1xf32>
    %79 = arith.divf %77, %78 : vector<8x1xf32>
    %80 = vector.broadcast %72 : vector<8x1xf32> to vector<8x32xf32>
    %81 = arith.subf %66, %80 : vector<8x32xf32>
    %cst_27 = arith.constant 9.99999974E-6 : f32
    %82 = vector.broadcast %cst_27 : f32 to vector<8x1xf32>
    %83 = arith.addf %79, %82 : vector<8x1xf32>
    %84 = math.rsqrt %83 : vector<8x1xf32>
    %85 = vector.broadcast %84 : vector<8x1xf32> to vector<8x32xf32>
    %86 = arith.mulf %81, %85 : vector<8x32xf32>
    %87 = vector.broadcast %67 : vector<1x32xf32> to vector<8x32xf32>
    %88 = arith.mulf %86, %87 : vector<8x32xf32>
    %89 = vector.broadcast %68 : vector<1x32xf32> to vector<8x32xf32>
    %90 = arith.addf %88, %89 : vector<8x32xf32>
    %c0_28 = arith.constant 0 : index
    %c0_29 = arith.constant 0 : index
    %91 = vector.load %arg9[%c0_28, %c0_29] : memref<32x32xf32, #tpu.memory_space<vmem>>, vector<32x32xf32>
    %cst_30 = arith.constant dense<0.000000e+00> : vector<8x32xf32>
    %92 = tpu.matmul %90, %91, %cst_30 {dimension_numbers = #tpu.dot_dimension_numbers<[1], [0], [0], [1], [0, 0, 1, 1], [], []>} : vector<8x32xf32>, vector<32x32xf32>, vector<8x32xf32> -> vector<8x32xf32>
    %c0_31 = arith.constant 0 : index
    %c0_32 = arith.constant 0 : index
    %93 = vector.load %arg10[%c0_31, %c0_32] : memref<1x32xf32, #tpu.memory_space<vmem>>, vector<1x32xf32>
    %94 = vector.broadcast %93 : vector<1x32xf32> to vector<8x32xf32>
    %95 = arith.addf %92, %94 : vector<8x32xf32>
    %c0_33 = arith.constant 0 : index
    %c0_34 = arith.constant 0 : index
    %96 = vector.load %arg11[%c0_33, %c0_34] : memref<32x128xf32, #tpu.memory_space<vmem>>, vector<32x128xf32>
    %cst_35 = arith.constant dense<0.000000e+00> : vector<16x128xf32>
    %97 = tpu.matmul %3, %96, %cst_35 {dimension_numbers = #tpu.dot_dimension_numbers<[1], [0], [0], [1], [0, 0, 1, 1], [], []>} : vector<16x32xf32>, vector<32x128xf32>, vector<16x128xf32> -> vector<16x128xf32>
    %c0_36 = arith.constant 0 : index
    %c0_37 = arith.constant 0 : index
    %98 = vector.load %arg12[%c0_36, %c0_37] : memref<1x128xf32, #tpu.memory_space<vmem>>, vector<1x128xf32>
    %99 = vector.broadcast %98 : vector<1x128xf32> to vector<16x128xf32>
    %100 = arith.addf %97, %99 : vector<16x128xf32>
    %101 = vector.extract_strided_slice %100 {offsets = [0, 0], sizes = [16, 32], strides = [1, 1]} : vector<16x128xf32> to vector<16x32xf32>
    %102 = vector.extract_strided_slice %100 {offsets = [0, 32], sizes = [16, 32], strides = [1, 1]} : vector<16x128xf32> to vector<16x32xf32>
    %103 = vector.extract_strided_slice %95 {offsets = [0, 0], sizes = [8, 8], strides = [1, 1]} : vector<8x32xf32> to vector<8x8xf32>
    %104 = vector.extract_strided_slice %95 {offsets = [0, 8], sizes = [8, 8], strides = [1, 1]} : vector<8x32xf32> to vector<8x8xf32>
    %105 = vector.extract_strided_slice %95 {offsets = [0, 16], sizes = [8, 8], strides = [1, 1]} : vector<8x32xf32> to vector<8x8xf32>
    %106 = vector.extract_strided_slice %95 {offsets = [0, 24], sizes = [8, 8], strides = [1, 1]} : vector<8x32xf32> to vector<8x8xf32>
    %107 = vector.shape_cast %103 : vector<8x8xf32> to vector<1x8x8xf32>
    %108 = vector.shape_cast %104 : vector<8x8xf32> to vector<1x8x8xf32>
    %109 = vector.shape_cast %105 : vector<8x8xf32> to vector<1x8x8xf32>
    %110 = vector.shape_cast %106 : vector<8x8xf32> to vector<1x8x8xf32>
    %111 = tpu.concatenate %107, %108, %109, %110 in 0 : vector<1x8x8xf32>, vector<1x8x8xf32>, vector<1x8x8xf32>, vector<1x8x8xf32> -> vector<4x8x8xf32>
    %112 = vector.extract_strided_slice %101 {offsets = [0, 0], sizes = [16, 8], strides = [1, 1]} : vector<16x32xf32> to vector<16x8xf32>
    %113 = vector.extract_strided_slice %101 {offsets = [0, 8], sizes = [16, 8], strides = [1, 1]} : vector<16x32xf32> to vector<16x8xf32>
    %114 = vector.extract_strided_slice %101 {offsets = [0, 16], sizes = [16, 8], strides = [1, 1]} : vector<16x32xf32> to vector<16x8xf32>
    %115 = vector.extract_strided_slice %101 {offsets = [0, 24], sizes = [16, 8], strides = [1, 1]} : vector<16x32xf32> to vector<16x8xf32>
    %116 = vector.shape_cast %112 : vector<16x8xf32> to vector<1x16x8xf32>
    %117 = vector.shape_cast %113 : vector<16x8xf32> to vector<1x16x8xf32>
    %118 = vector.shape_cast %114 : vector<16x8xf32> to vector<1x16x8xf32>
    %119 = vector.shape_cast %115 : vector<16x8xf32> to vector<1x16x8xf32>
    %120 = tpu.concatenate %116, %117, %118, %119 in 0 : vector<1x16x8xf32>, vector<1x16x8xf32>, vector<1x16x8xf32>, vector<1x16x8xf32> -> vector<4x16x8xf32>
    %121 = vector.extract_strided_slice %102 {offsets = [0, 0], sizes = [16, 8], strides = [1, 1]} : vector<16x32xf32> to vector<16x8xf32>
    %122 = vector.extract_strided_slice %102 {offsets = [0, 8], sizes = [16, 8], strides = [1, 1]} : vector<16x32xf32> to vector<16x8xf32>
    %123 = vector.extract_strided_slice %102 {offsets = [0, 16], sizes = [16, 8], strides = [1, 1]} : vector<16x32xf32> to vector<16x8xf32>
    %124 = vector.extract_strided_slice %102 {offsets = [0, 24], sizes = [16, 8], strides = [1, 1]} : vector<16x32xf32> to vector<16x8xf32>
    %125 = vector.shape_cast %121 : vector<16x8xf32> to vector<1x16x8xf32>
    %126 = vector.shape_cast %122 : vector<16x8xf32> to vector<1x16x8xf32>
    %127 = vector.shape_cast %123 : vector<16x8xf32> to vector<1x16x8xf32>
    %128 = vector.shape_cast %124 : vector<16x8xf32> to vector<1x16x8xf32>
    %129 = tpu.concatenate %125, %126, %127, %128 in 0 : vector<1x16x8xf32>, vector<1x16x8xf32>, vector<1x16x8xf32>, vector<1x16x8xf32> -> vector<4x16x8xf32>
    "tpu.trace_start"() <{level = 10 : i32, message = "hqd,hkd->hqk"}> : () -> ()
    %cst_38 = arith.constant dense<0.000000e+00> : vector<4x8x16xf32>
    %130 = tpu.matmul %111, %120, %cst_38 {dimension_numbers = #tpu.dot_dimension_numbers<[2], [2], [1], [1], [0, 0, 0, 1, 1, 1], [0], [0]>} : vector<4x8x8xf32>, vector<4x16x8xf32>, vector<4x8x16xf32> -> vector<4x8x16xf32>
    "tpu.trace_stop"() : () -> ()
    %cst_39 = arith.constant 0.353553385 : f32
    %131 = vector.broadcast %cst_39 : f32 to vector<4x8x16xf32>
    %132 = arith.mulf %130, %131 : vector<4x8x16xf32>
    %cst_40 = arith.constant dense<0xFF800000> : vector<4x8xf32>
    %133 = vector.multi_reduction <maximumf>, %132, %cst_40 [2] : vector<4x8x16xf32> to vector<4x8xf32>
    %134 = vector.shape_cast %133 : vector<4x8xf32> to vector<4x8x1xf32>
    %135 = vector.broadcast %134 : vector<4x8x1xf32> to vector<4x8x16xf32>
    %136 = arith.subf %132, %135 : vector<4x8x16xf32>
    %137 = math.exp %136 : vector<4x8x16xf32>
    %cst_41 = arith.constant dense<0.000000e+00> : vector<4x8xf32>
    %138 = vector.multi_reduction <add>, %137, %cst_41 [2] : vector<4x8x16xf32> to vector<4x8xf32>
    %139 = vector.shape_cast %138 : vector<4x8xf32> to vector<4x8x1xf32>
    %140 = vector.broadcast %139 : vector<4x8x1xf32> to vector<4x8x16xf32>
    %141 = arith.divf %137, %140 : vector<4x8x16xf32>
    "tpu.trace_start"() <{level = 10 : i32, message = "hqk,hkd->hqd"}> : () -> ()
    %cst_42 = arith.constant dense<0.000000e+00> : vector<4x8x8xf32>
    %142 = tpu.matmul %141, %129, %cst_42 {dimension_numbers = #tpu.dot_dimension_numbers<[2], [1], [1], [2], [0, 0, 0, 1, 1, 2], [0], [0]>} : vector<4x8x16xf32>, vector<4x16x8xf32>, vector<4x8x8xf32> -> vector<4x8x8xf32>
    "tpu.trace_stop"() : () -> ()
    %143 = vector.extract_strided_slice %142 {offsets = [0, 0, 0], sizes = [1, 8, 8], strides = [1, 1, 1]} : vector<4x8x8xf32> to vector<1x8x8xf32>
    %144 = vector.shape_cast %143 : vector<1x8x8xf32> to vector<8x8xf32>
    %145 = vector.extract_strided_slice %142 {offsets = [1, 0, 0], sizes = [1, 8, 8], strides = [1, 1, 1]} : vector<4x8x8xf32> to vector<1x8x8xf32>
    %146 = vector.shape_cast %145 : vector<1x8x8xf32> to vector<8x8xf32>
    %147 = vector.extract_strided_slice %142 {offsets = [2, 0, 0], sizes = [1, 8, 8], strides = [1, 1, 1]} : vector<4x8x8xf32> to vector<1x8x8xf32>
    %148 = vector.shape_cast %147 : vector<1x8x8xf32> to vector<8x8xf32>
    %149 = vector.extract_strided_slice %142 {offsets = [3, 0, 0], sizes = [1, 8, 8], strides = [1, 1, 1]} : vector<4x8x8xf32> to vector<1x8x8xf32>
    %150 = vector.shape_cast %149 : vector<1x8x8xf32> to vector<8x8xf32>
    %151 = tpu.concatenate %144, %146, %148, %150 in 1 : vector<8x8xf32>, vector<8x8xf32>, vector<8x8xf32>, vector<8x8xf32> -> vector<8x32xf32>
    %c0_43 = arith.constant 0 : index
    %c0_44 = arith.constant 0 : index
    %152 = vector.load %arg13[%c0_43, %c0_44] : memref<32x32xf32, #tpu.memory_space<vmem>>, vector<32x32xf32>
    %cst_45 = arith.constant dense<0.000000e+00> : vector<8x32xf32>
    %153 = tpu.matmul %151, %152, %cst_45 {dimension_numbers = #tpu.dot_dimension_numbers<[1], [0], [0], [1], [0, 0, 1, 1], [], []>} : vector<8x32xf32>, vector<32x32xf32>, vector<8x32xf32> -> vector<8x32xf32>
    %c0_46 = arith.constant 0 : index
    %c0_47 = arith.constant 0 : index
    %154 = vector.load %arg14[%c0_46, %c0_47] : memref<1x32xf32, #tpu.memory_space<vmem>>, vector<1x32xf32>
    %155 = vector.broadcast %154 : vector<1x32xf32> to vector<8x32xf32>
    %156 = arith.addf %153, %155 : vector<8x32xf32>
    %157 = arith.addf %156, %90 : vector<8x32xf32>
    %c0_48 = arith.constant 0 : index
    %c0_49 = arith.constant 0 : index
    %158 = vector.load %arg15[%c0_48, %c0_49] : memref<1x32xf32, #tpu.memory_space<vmem>>, vector<1x32xf32>
    %c0_50 = arith.constant 0 : index
    %c0_51 = arith.constant 0 : index
    %159 = vector.load %arg16[%c0_50, %c0_51] : memref<1x32xf32, #tpu.memory_space<vmem>>, vector<1x32xf32>
    %cst_52 = arith.constant dense<0.000000e+00> : vector<8xf32>
    %160 = vector.multi_reduction <add>, %157, %cst_52 [1] : vector<8x32xf32> to vector<8xf32>
    %161 = vector.shape_cast %160 : vector<8xf32> to vector<8x1xf32>
    %cst_53 = arith.constant 3.200000e+01 : f32
    %162 = vector.broadcast %cst_53 : f32 to vector<8x1xf32>
    %163 = arith.divf %161, %162 : vector<8x1xf32>
    %164 = vector.broadcast %163 : vector<8x1xf32> to vector<8x32xf32>
    %165 = arith.subf %157, %164 : vector<8x32xf32>
    %166 = arith.mulf %165, %165 : vector<8x32xf32>
    %cst_54 = arith.constant dense<0.000000e+00> : vector<8xf32>
    %167 = vector.multi_reduction <add>, %166, %cst_54 [1] : vector<8x32xf32> to vector<8xf32>
    %168 = vector.shape_cast %167 : vector<8xf32> to vector<8x1xf32>
    %cst_55 = arith.constant 3.200000e+01 : f32
    %169 = vector.broadcast %cst_55 : f32 to vector<8x1xf32>
    %170 = arith.divf %168, %169 : vector<8x1xf32>
    %171 = vector.broadcast %163 : vector<8x1xf32> to vector<8x32xf32>
    %172 = arith.subf %157, %171 : vector<8x32xf32>
    %cst_56 = arith.constant 9.99999974E-6 : f32
    %173 = vector.broadcast %cst_56 : f32 to vector<8x1xf32>
    %174 = arith.addf %170, %173 : vector<8x1xf32>
    %175 = math.rsqrt %174 : vector<8x1xf32>
    %176 = vector.broadcast %175 : vector<8x1xf32> to vector<8x32xf32>
    %177 = arith.mulf %172, %176 : vector<8x32xf32>
    %178 = vector.broadcast %158 : vector<1x32xf32> to vector<8x32xf32>
    %179 = arith.mulf %177, %178 : vector<8x32xf32>
    %180 = vector.broadcast %159 : vector<1x32xf32> to vector<8x32xf32>
    %181 = arith.addf %179, %180 : vector<8x32xf32>
    %c0_57 = arith.constant 0 : index
    %c0_58 = arith.constant 0 : index
    %182 = vector.load %arg17[%c0_57, %c0_58] : memref<32x128xf32, #tpu.memory_space<vmem>>, vector<32x128xf32>
    %cst_59 = arith.constant dense<0.000000e+00> : vector<8x128xf32>
    %183 = tpu.matmul %181, %182, %cst_59 {dimension_numbers = #tpu.dot_dimension_numbers<[1], [0], [0], [1], [0, 0, 1, 1], [], []>} : vector<8x32xf32>, vector<32x128xf32>, vector<8x128xf32> -> vector<8x128xf32>
    %c0_60 = arith.constant 0 : index
    %c0_61 = arith.constant 0 : index
    %184 = vector.load %arg18[%c0_60, %c0_61] : memref<1x128xf32, #tpu.memory_space<vmem>>, vector<1x128xf32>
    %185 = vector.broadcast %184 : vector<1x128xf32> to vector<8x128xf32>
    %186 = arith.addf %183, %185 : vector<8x128xf32>
    %cst_62 = arith.constant 0.000000e+00 : f32
    %187 = vector.broadcast %cst_62 : f32 to vector<8x128xf32>
    %188 = arith.maximumf %186, %187 : vector<8x128xf32>
    %c0_63 = arith.constant 0 : index
    %c0_64 = arith.constant 0 : index
    %189 = vector.load %arg19[%c0_63, %c0_64] : memref<128x32xf32, #tpu.memory_space<vmem>>, vector<128x32xf32>
    %cst_65 = arith.constant dense<0.000000e+00> : vector<8x32xf32>
    %190 = tpu.matmul %188, %189, %cst_65 {dimension_numbers = #tpu.dot_dimension_numbers<[1], [0], [0], [1], [0, 0, 1, 1], [], []>} : vector<8x128xf32>, vector<128x32xf32>, vector<8x32xf32> -> vector<8x32xf32>
    %c0_66 = arith.constant 0 : index
    %c0_67 = arith.constant 0 : index
    %191 = vector.load %arg20[%c0_66, %c0_67] : memref<1x32xf32, #tpu.memory_space<vmem>>, vector<1x32xf32>
    %192 = vector.broadcast %191 : vector<1x32xf32> to vector<8x32xf32>
    %193 = arith.addf %190, %192 : vector<8x32xf32>
    %194 = arith.addf %193, %181 : vector<8x32xf32>
    %c0_68 = arith.constant 0 : index
    %c0_69 = arith.constant 0 : index
    %195 = vector.load %arg21[%c0_68, %c0_69] : memref<1x32xf32, #tpu.memory_space<vmem>>, vector<1x32xf32>
    %c0_70 = arith.constant 0 : index
    %c0_71 = arith.constant 0 : index
    %196 = vector.load %arg22[%c0_70, %c0_71] : memref<1x32xf32, #tpu.memory_space<vmem>>, vector<1x32xf32>
    %cst_72 = arith.constant dense<0.000000e+00> : vector<8xf32>
    %197 = vector.multi_reduction <add>, %194, %cst_72 [1] : vector<8x32xf32> to vector<8xf32>
    %198 = vector.shape_cast %197 : vector<8xf32> to vector<8x1xf32>
    %cst_73 = arith.constant 3.200000e+01 : f32
    %199 = vector.broadcast %cst_73 : f32 to vector<8x1xf32>
    %200 = arith.divf %198, %199 : vector<8x1xf32>
    %201 = vector.broadcast %200 : vector<8x1xf32> to vector<8x32xf32>
    %202 = arith.subf %194, %201 : vector<8x32xf32>
    %203 = arith.mulf %202, %202 : vector<8x32xf32>
    %cst_74 = arith.constant dense<0.000000e+00> : vector<8xf32>
    %204 = vector.multi_reduction <add>, %203, %cst_74 [1] : vector<8x32xf32> to vector<8xf32>
    %205 = vector.shape_cast %204 : vector<8xf32> to vector<8x1xf32>
    %cst_75 = arith.constant 3.200000e+01 : f32
    %206 = vector.broadcast %cst_75 : f32 to vector<8x1xf32>
    %207 = arith.divf %205, %206 : vector<8x1xf32>
    %208 = vector.broadcast %200 : vector<8x1xf32> to vector<8x32xf32>
    %209 = arith.subf %194, %208 : vector<8x32xf32>
    %cst_76 = arith.constant 9.99999974E-6 : f32
    %210 = vector.broadcast %cst_76 : f32 to vector<8x1xf32>
    %211 = arith.addf %207, %210 : vector<8x1xf32>
    %212 = math.rsqrt %211 : vector<8x1xf32>
    %213 = vector.broadcast %212 : vector<8x1xf32> to vector<8x32xf32>
    %214 = arith.mulf %209, %213 : vector<8x32xf32>
    %215 = vector.broadcast %195 : vector<1x32xf32> to vector<8x32xf32>
    %216 = arith.mulf %214, %215 : vector<8x32xf32>
    %217 = vector.broadcast %196 : vector<1x32xf32> to vector<8x32xf32>
    %218 = arith.addf %216, %217 : vector<8x32xf32>
    %c0_77 = arith.constant 0 : index
    %c0_78 = arith.constant 0 : index
    %c0_79 = arith.constant 0 : index
    %219 = vector.load %arg23[%c0_77, %c0_78, %c0_79] : memref<1x8x32xf32, #tpu.memory_space<vmem>>, vector<1x8x32xf32>
    %220 = vector.shape_cast %219 : vector<1x8x32xf32> to vector<8x32xf32>
    %221 = vector.shape_cast %218 : vector<8x32xf32> to vector<1x8x32xf32>
    tpu.vector_store %arg23[%c0_77, %c0_78, %c0_79], %221 {strides = array<i32>} : memref<1x8x32xf32, #tpu.memory_space<vmem>>, vector<1x8x32xf32>,
    return
  }
  func.func @transform_0(%arg0: i32) -> (i32, i32, i32) {
    %c0_i32 = arith.constant 0 : i32
    %c0_i32_0 = arith.constant 0 : i32
    %c0_i32_1 = arith.constant 0 : i32
    return %arg0, %c0_i32, %c0_i32_0 : i32, i32, i32
  }
  func.func @transform_1(%arg0: i32) -> (i32, i32, i32) {
    %c0_i32 = arith.constant 0 : i32
    %c0_i32_0 = arith.constant 0 : i32
    %c0_i32_1 = arith.constant 0 : i32
    return %arg0, %c0_i32, %c0_i32_0 : i32, i32, i32
  }
  func.func @transform_2(%arg0: i32) -> (i32, i32) {
    %c0_i32 = arith.constant 0 : i32
    %c0_i32_0 = arith.constant 0 : i32
    %c0_i32_1 = arith.constant 0 : i32
    return %c0_i32, %c0_i32_0 : i32, i32
  }
  func.func @transform_3(%arg0: i32) -> (i32, i32) {
    %c0_i32 = arith.constant 0 : i32
    %c0_i32_0 = arith.constant 0 : i32
    %c0_i32_1 = arith.constant 0 : i32
    return %c0_i32, %c0_i32_0 : i32, i32
  }
  func.func @transform_4(%arg0: i32) -> (i32, i32) {
    %c0_i32 = arith.constant 0 : i32
    %c0_i32_0 = arith.constant 0 : i32
    %c0_i32_1 = arith.constant 0 : i32
    return %c0_i32, %c0_i32_0 : i32, i32
  }
  func.func @transform_5(%arg0: i32) -> (i32, i32) {
    %c0_i32 = arith.constant 0 : i32
    %c0_i32_0 = arith.constant 0 : i32
    %c0_i32_1 = arith.constant 0 : i32
    return %c0_i32, %c0_i32_0 : i32, i32
  }
  func.func @transform_6(%arg0: i32) -> (i32, i32) {
    %c0_i32 = arith.constant 0 : i32
    %c0_i32_0 = arith.constant 0 : i32
    %c0_i32_1 = arith.constant 0 : i32
    return %c0_i32, %c0_i32_0 : i32, i32
  }
  func.func @transform_7(%arg0: i32) -> (i32, i32) {
    %c0_i32 = arith.constant 0 : i32
    %c0_i32_0 = arith.constant 0 : i32
    %c0_i32_1 = arith.constant 0 : i32
    return %c0_i32, %c0_i32_0 : i32, i32
  }
  func.func @transform_8(%arg0: i32) -> (i32, i32) {
    %c0_i32 = arith.constant 0 : i32
    %c0_i32_0 = arith.constant 0 : i32
    %c0_i32_1 = arith.constant 0 : i32
    return %c0_i32, %c0_i32_0 : i32, i32
  }
  func.func @transform_9(%arg0: i32) -> (i32, i32) {
    %c0_i32 = arith.constant 0 : i32
    %c0_i32_0 = arith.constant 0 : i32
    %c0_i32_1 = arith.constant 0 : i32
    return %c0_i32, %c0_i32_0 : i32, i32
  }
  func.func @transform_10(%arg0: i32) -> (i32, i32) {
    %c0_i32 = arith.constant 0 : i32
    %c0_i32_0 = arith.constant 0 : i32
    %c0_i32_1 = arith.constant 0 : i32
    return %c0_i32, %c0_i32_0 : i32, i32
  }
  func.func @transform_11(%arg0: i32) -> (i32, i32) {
    %c0_i32 = arith.constant 0 : i32
    %c0_i32_0 = arith.constant 0 : i32
    %c0_i32_1 = arith.constant 0 : i32
    return %c0_i32, %c0_i32_0 : i32, i32
  }
  func.func @transform_12(%arg0: i32) -> (i32, i32) {
    %c0_i32 = arith.constant 0 : i32
    %c0_i32_0 = arith.constant 0 : i32
    %c0_i32_1 = arith.constant 0 : i32
    return %c0_i32, %c0_i32_0 : i32, i32
  }
  func.func @transform_13(%arg0: i32) -> (i32, i32) {
    %c0_i32 = arith.constant 0 : i32
    %c0_i32_0 = arith.constant 0 : i32
    %c0_i32_1 = arith.constant 0 : i32
    return %c0_i32, %c0_i32_0 : i32, i32
  }
  func.func @transform_14(%arg0: i32) -> (i32, i32) {
    %c0_i32 = arith.constant 0 : i32
    %c0_i32_0 = arith.constant 0 : i32
    %c0_i32_1 = arith.constant 0 : i32
    return %c0_i32, %c0_i32_0 : i32, i32
  }
  func.func @transform_15(%arg0: i32) -> (i32, i32) {
    %c0_i32 = arith.constant 0 : i32
    %c0_i32_0 = arith.constant 0 : i32
    %c0_i32_1 = arith.constant 0 : i32
    return %c0_i32, %c0_i32_0 : i32, i32
  }
  func.func @transform_16(%arg0: i32) -> (i32, i32) {
    %c0_i32 = arith.constant 0 : i32
    %c0_i32_0 = arith.constant 0 : i32
    %c0_i32_1 = arith.constant 0 : i32
    return %c0_i32, %c0_i32_0 : i32, i32
  }
  func.func @transform_17(%arg0: i32) -> (i32, i32) {
    %c0_i32 = arith.constant 0 : i32
    %c0_i32_0 = arith.constant 0 : i32
    %c0_i32_1 = arith.constant 0 : i32
    return %c0_i32, %c0_i32_0 : i32, i32
  }
  func.func @transform_18(%arg0: i32) -> (i32, i32) {
    %c0_i32 = arith.constant 0 : i32
    %c0_i32_0 = arith.constant 0 : i32
    %c0_i32_1 = arith.constant 0 : i32
    return %c0_i32, %c0_i32_0 : i32, i32
  }
  func.func @transform_19(%arg0: i32) -> (i32, i32) {
    %c0_i32 = arith.constant 0 : i32
    %c0_i32_0 = arith.constant 0 : i32
    %c0_i32_1 = arith.constant 0 : i32
    return %c0_i32, %c0_i32_0 : i32, i32
  }
  func.func @transform_20(%arg0: i32) -> (i32, i32) {
    %c0_i32 = arith.constant 0 : i32
    %c0_i32_0 = arith.constant 0 : i32
    %c0_i32_1 = arith.constant 0 : i32
    return %c0_i32, %c0_i32_0 : i32, i32
  }
  func.func @transform_21(%arg0: i32) -> (i32, i32) {
    %c0_i32 = arith.constant 0 : i32
    %c0_i32_0 = arith.constant 0 : i32
    %c0_i32_1 = arith.constant 0 : i32
    return %c0_i32, %c0_i32_0 : i32, i32
  }
  func.func @transform_22(%arg0: i32) -> (i32, i32, i32) {
    %c0_i32 = arith.constant 0 : i32
    %c0_i32_0 = arith.constant 0 : i32
    %c0_i32_1 = arith.constant 0 : i32
    return %arg0, %c0_i32, %c0_i32_0 : i32, i32, i32
  }
}

</mosaic_0001>

<llo_original>
// kernel: transformer_decoder_layer.1
$region0: #{transformer_decoder_layer.1}
  #allocation0 [shape = 'u32[]', space=smem, size = 0x4, offset = 0x4, fixed_abs, tag = 'smem constant byte address 0x4 - core index']
  #allocation1 [shape = 'u32[72,128]{1,0:T(1,128)}', space=vmem, size = 0x9000, scoped, tag = 'internal scratch']
  %s0 = inlined_call_operand.vmem [shape: f32[2,8,32], index: 0, kind: input, shape index: {}]
  %s1 = inlined_call_operand.vmem [shape: f32[2,16,32], index: 1, kind: input, shape index: {}]
  %s2 = inlined_call_operand.vmem [shape: f32[32,128], index: 2, kind: input, shape index: {}]
  %s3 = inlined_call_operand.vmem [shape: f32[1,128], index: 3, kind: input, shape index: {}]
  %s4 = inlined_call_operand.vmem [shape: f32[32,32], index: 4, kind: input, shape index: {}]
  %s5 = inlined_call_operand.vmem [shape: f32[1,32], index: 5, kind: input, shape index: {}]
  %s6 = inlined_call_operand.vmem [shape: f32[1,32], index: 6, kind: input, shape index: {}]
  %s7 = inlined_call_operand.vmem [shape: f32[1,32], index: 7, kind: input, shape index: {}]
  %s8 = inlined_call_operand.vmem [shape: f32[32,32], index: 8, kind: input, shape index: {}]
  %s9 = inlined_call_operand.vmem [shape: f32[1,32], index: 9, kind: input, shape index: {}]
  %s10 = inlined_call_operand.vmem [shape: f32[32,128], index: 10, kind: input, shape index: {}]
  %s11 = inlined_call_operand.vmem [shape: f32[1,128], index: 11, kind: input, shape index: {}]
  %s12 = inlined_call_operand.vmem [shape: f32[32,32], index: 12, kind: input, shape index: {}]
  %s13 = inlined_call_operand.vmem [shape: f32[1,32], index: 13, kind: input, shape index: {}]
  %s14 = inlined_call_operand.vmem [shape: f32[1,32], index: 14, kind: input, shape index: {}]
  %s15 = inlined_call_operand.vmem [shape: f32[1,32], index: 15, kind: input, shape index: {}]
  %s16 = inlined_call_operand.vmem [shape: f32[32,128], index: 16, kind: input, shape index: {}]
  %s17 = inlined_call_operand.vmem [shape: f32[1,128], index: 17, kind: input, shape index: {}]
  %s18 = inlined_call_operand.vmem [shape: f32[128,32], index: 18, kind: input, shape index: {}]
  %s19 = inlined_call_operand.vmem [shape: f32[1,32], index: 19, kind: input, shape index: {}]
  %s20 = inlined_call_operand.vmem [shape: f32[1,32], index: 20, kind: input, shape index: {}]
  %s21 = inlined_call_operand.vmem [shape: f32[1,32], index: 21, kind: input, shape index: {}]
  %s22 = inlined_call_operand.hbm [shape: f32[2,8,32], index: 22, kind: output, shape index: {}]
  %s23 = sld [smem:[#allocation0]]
  $region121: #{transformer_decoder_layer.1} parent=0
    _
  %s25 = ssub.s32 1, %s23
  %s26 = scalar_select 0, %s25, %s23
  $region1: #{transformer_decoder_layer.1} parent=0
    #allocation2 [shape = 'u8[8192]{0}', space=vmem, size = 0x2000, scoped, tag = 'output window, operand 0']
    #allocation3 [shape = 's32[2]{0}', space=sflag, size = 0x8, scoped, tag = 'scoped memory for transformer_decoder_layer.1']
    %27 = vsyncpa [#allocation3], 0
    %s28 = scalar_lea.sflag [#allocation3], 1
    %29 = vsyncpa %s28, 0
    loop: start=0, step=1, limit=4
    $region2: #{transformer_decoder_layer.1} parent=1 // loop_pre_header
      _
    $region3: #{transformer_decoder_layer.1} parent=1 // loop_header
      %s31 = sphi 0, %s35
      %p32 = scmp.ge.s32.totalorder %s31, 4
      %s41 = sphi 0, %s43
      %s44 = sphi 0, %s41
      %s45 = sphi 0, %s44
      %s61 = sphi 0, %s45
      %s67 = sphi 0, %s69
      %s70 = sphi 0, %s67
      %s71 = sphi 0, %s70
      %s87 = sphi 0, %s71
      %s91 = sphi 0, %s91
      %s93 = sphi 0, %s91
      %s94 = sphi 0, %s93
      %s108 = sphi 0, %s94
      %s112 = sphi 0, %s112
      %s114 = sphi 0, %s112
      %s115 = sphi 0, %s114
      %s129 = sphi 0, %s115
      %s133 = sphi 0, %s133
      %s135 = sphi 0, %s133
      %s136 = sphi 0, %s135
      %s150 = sphi 0, %s136
      %s154 = sphi 0, %s154
      %s156 = sphi 0, %s154
      %s157 = sphi 0, %s156
      %s171 = sphi 0, %s157
      %s175 = sphi 0, %s175
      %s177 = sphi 0, %s175
      %s178 = sphi 0, %s177
      %s192 = sphi 0, %s178
      %s196 = sphi 0, %s196
      %s198 = sphi 0, %s196
      %s199 = sphi 0, %s198
      %s213 = sphi 0, %s199
      %s217 = sphi 0, %s217
      %s219 = sphi 0, %s217
      %s220 = sphi 0, %s219
      %s234 = sphi 0, %s220
      %s238 = sphi 0, %s238
      %s240 = sphi 0, %s238
      %s241 = sphi 0, %s240
      %s255 = sphi 0, %s241
      %s259 = sphi 0, %s259
      %s261 = sphi 0, %s259
      %s262 = sphi 0, %s261
      %s276 = sphi 0, %s262
      %s280 = sphi 0, %s280
      %s282 = sphi 0, %s280
      %s283 = sphi 0, %s282
      %s297 = sphi 0, %s283
      %s301 = sphi 0, %s301
      %s303 = sphi 0, %s301
      %s304 = sphi 0, %s303
      %s318 = sphi 0, %s304
      %s322 = sphi 0, %s322
      %s324 = sphi 0, %s322
      %s325 = sphi 0, %s324
      %s339 = sphi 0, %s325
      %s343 = sphi 0, %s343
      %s345 = sphi 0, %s343
      %s346 = sphi 0, %s345
      %s360 = sphi 0, %s346
      %s364 = sphi 0, %s364
      %s366 = sphi 0, %s364
      %s367 = sphi 0, %s366
      %s381 = sphi 0, %s367
      %s385 = sphi 0, %s385
      %s387 = sphi 0, %s385
      %s388 = sphi 0, %s387
      %s402 = sphi 0, %s388
      %s406 = sphi 0, %s406
      %s408 = sphi 0, %s406
      %s409 = sphi 0, %s408
      %s423 = sphi 0, %s409
      %s427 = sphi 0, %s427
      %s429 = sphi 0, %s427
      %s430 = sphi 0, %s429
      %s444 = sphi 0, %s430
      %s448 = sphi 0, %s448
      %s450 = sphi 0, %s448
      %s451 = sphi 0, %s450
      %s465 = sphi 0, %s451
      %s469 = sphi 0, %s469
      %s471 = sphi 0, %s469
      %s472 = sphi 0, %s471
      %s486 = sphi 0, %s472
      %s490 = sphi 0, %s490
      %s492 = sphi 0, %s490
      %s493 = sphi 0, %s492
      %s507 = sphi 0, %s493
      %s513 = sphi 0, %s515
      %s516 = sphi 0, %s513
      %s517 = sphi 0, %s516
      %s533 = sphi 0, %s517
    $region4: #{transformer_decoder_layer.1} parent=1 // loop_header_branch
      %34 = sbr.rel (%p32) target = $region8
    $region5: #{transformer_decoder_layer.1} parent=1 // loop_body
      %s36 = ssub.s32 %s31, 1
      %s37 = ssub.s32 %s31, 2
      %s38 = sadd.s32 %s31, 1
      %s39 = ssub.s32 %s31, %s38
      %p40 = scmp.eq.s32.totalorder %s39, 0
      %s42 = sadd.s32 %s41, 1
      %s43 = scalar_select %p40, %s41, %s42
      %p46 = pneg %p40
      %p47 = scmp.eq.s32.totalorder %s31, 1
      %p48 = por %p46, %p47
      %p49 = scmp.ne.s32.totalorder %s41, %s44
      %p50 = scmp.eq.s32.totalorder %s31, 0
      %p51 = por %p49, %p50
      %p52 = scmp.ne.s32.totalorder %s41, %s44
      %p53 = scmp.eq.s32.totalorder %s36, 1
      %p54 = por %p52, %p53
      %p55 = scmp.ne.s32.totalorder %s44, %s45
      %p56 = scmp.eq.s32.totalorder %s36, 0
      %p57 = por %p55, %p56
      %p58 = scmp.ne.s32.totalorder %s44, %s45
      %p59 = scmp.eq.s32.totalorder %s37, 1
      %p60 = por %p58, %p59
      %p62 = scmp.ne.s32.totalorder %s45, %s61
      %p63 = scmp.eq.s32.totalorder %s37, 0
      %p64 = por %p62, %p63
      %s65 = ssub.s32 %s31, %s38
      %p66 = scmp.eq.s32.totalorder %s65, 0
      %s68 = sadd.s32 %s67, 1
      %s69 = scalar_select %p66, %s67, %s68
      %p72 = pneg %p66
      %p73 = scmp.eq.s32.totalorder %s31, 1
      %p74 = por %p72, %p73
      %p75 = scmp.ne.s32.totalorder %s67, %s70
      %p76 = scmp.eq.s32.totalorder %s31, 0
      %p77 = por %p75, %p76
      %p78 = scmp.ne.s32.totalorder %s67, %s70
      %p79 = scmp.eq.s32.totalorder %s36, 1
      %p80 = por %p78, %p79
      %p81 = scmp.ne.s32.totalorder %s70, %s71
      %p82 = scmp.eq.s32.totalorder %s36, 0
      %p83 = por %p81, %p82
      %p84 = scmp.ne.s32.totalorder %s70, %s71
      %p85 = scmp.eq.s32.totalorder %s37, 1
      %p86 = por %p84, %p85
      %p88 = scmp.ne.s32.totalorder %s71, %s87
      %p89 = scmp.eq.s32.totalorder %s37, 0
      %p90 = por %p88, %p89
      %s92 = sadd.s32 %s91, 1
      %p95 = scmp.eq.s32.totalorder %s31, 1
      %p96 = scmp.ne.s32.totalorder %s91, %s93
      %p97 = scmp.eq.s32.totalorder %s31, 0
      %p98 = por %p96, %p97
      %p99 = scmp.ne.s32.totalorder %s91, %s93
      %p100 = scmp.eq.s32.totalorder %s36, 1
      %p101 = por %p99, %p100
      %p102 = scmp.ne.s32.totalorder %s93, %s94
      %p103 = scmp.eq.s32.totalorder %s36, 0
      %p104 = por %p102, %p103
      %p105 = scmp.ne.s32.totalorder %s93, %s94
      %p106 = scmp.eq.s32.totalorder %s37, 1
      %p107 = por %p105, %p106
      %p109 = scmp.ne.s32.totalorder %s94, %s108
      %p110 = scmp.eq.s32.totalorder %s37, 0
      %p111 = por %p109, %p110
      %s113 = sadd.s32 %s112, 1
      %p116 = scmp.eq.s32.totalorder %s31, 1
      %p117 = scmp.ne.s32.totalorder %s112, %s114
      %p118 = scmp.eq.s32.totalorder %s31, 0
      %p119 = por %p117, %p118
      %p120 = scmp.ne.s32.totalorder %s112, %s114
      %p121 = scmp.eq.s32.totalorder %s36, 1
      %p122 = por %p120, %p121
      %p123 = scmp.ne.s32.totalorder %s114, %s115
      %p124 = scmp.eq.s32.totalorder %s36, 0
      %p125 = por %p123, %p124
      %p126 = scmp.ne.s32.totalorder %s114, %s115
      %p127 = scmp.eq.s32.totalorder %s37, 1
      %p128 = por %p126, %p127
      %p130 = scmp.ne.s32.totalorder %s115, %s129
      %p131 = scmp.eq.s32.totalorder %s37, 0
      %p132 = por %p130, %p131
      %s134 = sadd.s32 %s133, 1
      %p137 = scmp.eq.s32.totalorder %s31, 1
      %p138 = scmp.ne.s32.totalorder %s133, %s135
      %p139 = scmp.eq.s32.totalorder %s31, 0
      %p140 = por %p138, %p139
      %p141 = scmp.ne.s32.totalorder %s133, %s135
      %p142 = scmp.eq.s32.totalorder %s36, 1
      %p143 = por %p141, %p142
      %p144 = scmp.ne.s32.totalorder %s135, %s136
      %p145 = scmp.eq.s32.totalorder %s36, 0
      %p146 = por %p144, %p145
      %p147 = scmp.ne.s32.totalorder %s135, %s136
      %p148 = scmp.eq.s32.totalorder %s37, 1
      %p149 = por %p147, %p148
      %p151 = scmp.ne.s32.totalorder %s136, %s150
      %p152 = scmp.eq.s32.totalorder %s37, 0
      %p153 = por %p151, %p152
      %s155 = sadd.s32 %s154, 1
      %p158 = scmp.eq.s32.totalorder %s31, 1
      %p159 = scmp.ne.s32.totalorder %s154, %s156
      %p160 = scmp.eq.s32.totalorder %s31, 0
      %p161 = por %p159, %p160
      %p162 = scmp.ne.s32.totalorder %s154, %s156
      %p163 = scmp.eq.s32.totalorder %s36, 1
      %p164 = por %p162, %p163
      %p165 = scmp.ne.s32.totalorder %s156, %s157
      %p166 = scmp.eq.s32.totalorder %s36, 0
      %p167 = por %p165, %p166
      %p168 = scmp.ne.s32.totalorder %s156, %s157
      %p169 = scmp.eq.s32.totalorder %s37, 1
      %p170 = por %p168, %p169
      %p172 = scmp.ne.s32.totalorder %s157, %s171
      %p173 = scmp.eq.s32.totalorder %s37, 0
      %p174 = por %p172, %p173
      %s176 = sadd.s32 %s175, 1
      %p179 = scmp.eq.s32.totalorder %s31, 1
      %p180 = scmp.ne.s32.totalorder %s175, %s177
      %p181 = scmp.eq.s32.totalorder %s31, 0
      %p182 = por %p180, %p181
      %p183 = scmp.ne.s32.totalorder %s175, %s177
      %p184 = scmp.eq.s32.totalorder %s36, 1
      %p185 = por %p183, %p184
      %p186 = scmp.ne.s32.totalorder %s177, %s178
      %p187 = scmp.eq.s32.totalorder %s36, 0
      %p188 = por %p186, %p187
      %p189 = scmp.ne.s32.totalorder %s177, %s178
      %p190 = scmp.eq.s32.totalorder %s37, 1
      %p191 = por %p189, %p190
      %p193 = scmp.ne.s32.totalorder %s178, %s192
      %p194 = scmp.eq.s32.totalorder %s37, 0
      %p195 = por %p193, %p194
      %s197 = sadd.s32 %s196, 1
      %p200 = scmp.eq.s32.totalorder %s31, 1
      %p201 = scmp.ne.s32.totalorder %s196, %s198
      %p202 = scmp.eq.s32.totalorder %s31, 0
      %p203 = por %p201, %p202
      %p204 = scmp.ne.s32.totalorder %s196, %s198
      %p205 = scmp.eq.s32.totalorder %s36, 1
      %p206 = por %p204, %p205
      %p207 = scmp.ne.s32.totalorder %s198, %s199
      %p208 = scmp.eq.s32.totalorder %s36, 0
      %p209 = por %p207, %p208
      %p210 = scmp.ne.s32.totalorder %s198, %s199
      %p211 = scmp.eq.s32.totalorder %s37, 1
      %p212 = por %p210, %p211
      %p214 = scmp.ne.s32.totalorder %s199, %s213
      %p215 = scmp.eq.s32.totalorder %s37, 0
      %p216 = por %p214, %p215
      %s218 = sadd.s32 %s217, 1
      %p221 = scmp.eq.s32.totalorder %s31, 1
      %p222 = scmp.ne.s32.totalorder %s217, %s219
      %p223 = scmp.eq.s32.totalorder %s31, 0
      %p224 = por %p222, %p223
      %p225 = scmp.ne.s32.totalorder %s217, %s219
      %p226 = scmp.eq.s32.totalorder %s36, 1
      %p227 = por %p225, %p226
      %p228 = scmp.ne.s32.totalorder %s219, %s220
      %p229 = scmp.eq.s32.totalorder %s36, 0
      %p230 = por %p228, %p229
      %p231 = scmp.ne.s32.totalorder %s219, %s220
      %p232 = scmp.eq.s32.totalorder %s37, 1
      %p233 = por %p231, %p232
      %p235 = scmp.ne.s32.totalorder %s220, %s234
      %p236 = scmp.eq.s32.totalorder %s37, 0
      %p237 = por %p235, %p236
      %s239 = sadd.s32 %s238, 1
      %p242 = scmp.eq.s32.totalorder %s31, 1
      %p243 = scmp.ne.s32.totalorder %s238, %s240
      %p244 = scmp.eq.s32.totalorder %s31, 0
      %p245 = por %p243, %p244
      %p246 = scmp.ne.s32.totalorder %s238, %s240
      %p247 = scmp.eq.s32.totalorder %s36, 1
      %p248 = por %p246, %p247
      %p249 = scmp.ne.s32.totalorder %s240, %s241
      %p250 = scmp.eq.s32.totalorder %s36, 0
      %p251 = por %p249, %p250
      %p252 = scmp.ne.s32.totalorder %s240, %s241
      %p253 = scmp.eq.s32.totalorder %s37, 1
      %p254 = por %p252, %p253
      %p256 = scmp.ne.s32.totalorder %s241, %s255
      %p257 = scmp.eq.s32.totalorder %s37, 0
      %p258 = por %p256, %p257
      %s260 = sadd.s32 %s259, 1
      %p263 = scmp.eq.s32.totalorder %s31, 1
      %p264 = scmp.ne.s32.totalorder %s259, %s261
      %p265 = scmp.eq.s32.totalorder %s31, 0
      %p266 = por %p264, %p265
      %p267 = scmp.ne.s32.totalorder %s259, %s261
      %p268 = scmp.eq.s32.totalorder %s36, 1
      %p269 = por %p267, %p268
      %p270 = scmp.ne.s32.totalorder %s261, %s262
      %p271 = scmp.eq.s32.totalorder %s36, 0
      %p272 = por %p270, %p271
      %p273 = scmp.ne.s32.totalorder %s261, %s262
      %p274 = scmp.eq.s32.totalorder %s37, 1
      %p275 = por %p273, %p274
      %p277 = scmp.ne.s32.totalorder %s262, %s276
      %p278 = scmp.eq.s32.totalorder %s37, 0
      %p279 = por %p277, %p278
      %s281 = sadd.s32 %s280, 1
      %p284 = scmp.eq.s32.totalorder %s31, 1
      %p285 = scmp.ne.s32.totalorder %s280, %s282
      %p286 = scmp.eq.s32.totalorder %s31, 0
      %p287 = por %p285, %p286
      %p288 = scmp.ne.s32.totalorder %s280, %s282
      %p289 = scmp.eq.s32.totalorder %s36, 1
      %p290 = por %p288, %p289
      %p291 = scmp.ne.s32.totalorder %s282, %s283
      %p292 = scmp.eq.s32.totalorder %s36, 0
      %p293 = por %p291, %p292
      %p294 = scmp.ne.s32.totalorder %s282, %s283
      %p295 = scmp.eq.s32.totalorder %s37, 1
      %p296 = por %p294, %p295
      %p298 = scmp.ne.s32.totalorder %s283, %s297
      %p299 = scmp.eq.s32.totalorder %s37, 0
      %p300 = por %p298, %p299
      %s302 = sadd.s32 %s301, 1
      %p305 = scmp.eq.s32.totalorder %s31, 1
      %p306 = scmp.ne.s32.totalorder %s301, %s303
      %p307 = scmp.eq.s32.totalorder %s31, 0
      %p308 = por %p306, %p307
      %p309 = scmp.ne.s32.totalorder %s301, %s303
      %p310 = scmp.eq.s32.totalorder %s36, 1
      %p311 = por %p309, %p310
      %p312 = scmp.ne.s32.totalorder %s303, %s304
      %p313 = scmp.eq.s32.totalorder %s36, 0
      %p314 = por %p312, %p313
      %p315 = scmp.ne.s32.totalorder %s303, %s304
      %p316 = scmp.eq.s32.totalorder %s37, 1
      %p317 = por %p315, %p316
      %p319 = scmp.ne.s32.totalorder %s304, %s318
      %p320 = scmp.eq.s32.totalorder %s37, 0
      %p321 = por %p319, %p320
      %s323 = sadd.s32 %s322, 1
      %p326 = scmp.eq.s32.totalorder %s31, 1
      %p327 = scmp.ne.s32.totalorder %s322, %s324
      %p328 = scmp.eq.s32.totalorder %s31, 0
      %p329 = por %p327, %p328
      %p330 = scmp.ne.s32.totalorder %s322, %s324
      %p331 = scmp.eq.s32.totalorder %s36, 1
      %p332 = por %p330, %p331
      %p333 = scmp.ne.s32.totalorder %s324, %s325
      %p334 = scmp.eq.s32.totalorder %s36, 0
      %p335 = por %p333, %p334
      %p336 = scmp.ne.s32.totalorder %s324, %s325
      %p337 = scmp.eq.s32.totalorder %s37, 1
      %p338 = por %p336, %p337
      %p340 = scmp.ne.s32.totalorder %s325, %s339
      %p341 = scmp.eq.s32.totalorder %s37, 0
      %p342 = por %p340, %p341
      %s344 = sadd.s32 %s343, 1
      %p347 = scmp.eq.s32.totalorder %s31, 1
      %p348 = scmp.ne.s32.totalorder %s343, %s345
      %p349 = scmp.eq.s32.totalorder %s31, 0
      %p350 = por %p348, %p349
      %p351 = scmp.ne.s32.totalorder %s343, %s345
      %p352 = scmp.eq.s32.totalorder %s36, 1
      %p353 = por %p351, %p352
      %p354 = scmp.ne.s32.totalorder %s345, %s346
      %p355 = scmp.eq.s32.totalorder %s36, 0
      %p356 = por %p354, %p355
      %p357 = scmp.ne.s32.totalorder %s345, %s346
      %p358 = scmp.eq.s32.totalorder %s37, 1
      %p359 = por %p357, %p358
      %p361 = scmp.ne.s32.totalorder %s346, %s360
      %p362 = scmp.eq.s32.totalorder %s37, 0
      %p363 = por %p361, %p362
      %s365 = sadd.s32 %s364, 1
      %p368 = scmp.eq.s32.totalorder %s31, 1
      %p369 = scmp.ne.s32.totalorder %s364, %s366
      %p370 = scmp.eq.s32.totalorder %s31, 0
      %p371 = por %p369, %p370
      %p372 = scmp.ne.s32.totalorder %s364, %s366
      %p373 = scmp.eq.s32.totalorder %s36, 1
      %p374 = por %p372, %p373
      %p375 = scmp.ne.s32.totalorder %s366, %s367
      %p376 = scmp.eq.s32.totalorder %s36, 0
      %p377 = por %p375, %p376
      %p378 = scmp.ne.s32.totalorder %s366, %s367
      %p379 = scmp.eq.s32.totalorder %s37, 1
      %p380 = por %p378, %p379
      %p382 = scmp.ne.s32.totalorder %s367, %s381
      %p383 = scmp.eq.s32.totalorder %s37, 0
      %p384 = por %p382, %p383
      %s386 = sadd.s32 %s385, 1
      %p389 = scmp.eq.s32.totalorder %s31, 1
      %p390 = scmp.ne.s32.totalorder %s385, %s387
      %p391 = scmp.eq.s32.totalorder %s31, 0
      %p392 = por %p390, %p391
      %p393 = scmp.ne.s32.totalorder %s385, %s387
      %p394 = scmp.eq.s32.totalorder %s36, 1
      %p395 = por %p393, %p394
      %p396 = scmp.ne.s32.totalorder %s387, %s388
      %p397 = scmp.eq.s32.totalorder %s36, 0
      %p398 = por %p396, %p397
      %p399 = scmp.ne.s32.totalorder %s387, %s388
      %p400 = scmp.eq.s32.totalorder %s37, 1
      %p401 = por %p399, %p400
      %p403 = scmp.ne.s32.totalorder %s388, %s402
      %p404 = scmp.eq.s32.totalorder %s37, 0
      %p405 = por %p403, %p404
      %s407 = sadd.s32 %s406, 1
      %p410 = scmp.eq.s32.totalorder %s31, 1
      %p411 = scmp.ne.s32.totalorder %s406, %s408
      %p412 = scmp.eq.s32.totalorder %s31, 0
      %p413 = por %p411, %p412
      %p414 = scmp.ne.s32.totalorder %s406, %s408
      %p415 = scmp.eq.s32.totalorder %s36, 1
      %p416 = por %p414, %p415
      %p417 = scmp.ne.s32.totalorder %s408, %s409
      %p418 = scmp.eq.s32.totalorder %s36, 0
      %p419 = por %p417, %p418
      %p420 = scmp.ne.s32.totalorder %s408, %s409
      %p421 = scmp.eq.s32.totalorder %s37, 1
      %p422 = por %p420, %p421
      %p424 = scmp.ne.s32.totalorder %s409, %s423
      %p425 = scmp.eq.s32.totalorder %s37, 0
      %p426 = por %p424, %p425
      %s428 = sadd.s32 %s427, 1
      %p431 = scmp.eq.s32.totalorder %s31, 1
      %p432 = scmp.ne.s32.totalorder %s427, %s429
      %p433 = scmp.eq.s32.totalorder %s31, 0
      %p434 = por %p432, %p433
      %p435 = scmp.ne.s32.totalorder %s427, %s429
      %p436 = scmp.eq.s32.totalorder %s36, 1
      %p437 = por %p435, %p436
      %p438 = scmp.ne.s32.totalorder %s429, %s430
      %p439 = scmp.eq.s32.totalorder %s36, 0
      %p440 = por %p438, %p439
      %p441 = scmp.ne.s32.totalorder %s429, %s430
      %p442 = scmp.eq.s32.totalorder %s37, 1
      %p443 = por %p441, %p442
      %p445 = scmp.ne.s32.totalorder %s430, %s444
      %p446 = scmp.eq.s32.totalorder %s37, 0
      %p447 = por %p445, %p446
      %s449 = sadd.s32 %s448, 1
      %p452 = scmp.eq.s32.totalorder %s31, 1
      %p453 = scmp.ne.s32.totalorder %s448, %s450
      %p454 = scmp.eq.s32.totalorder %s31, 0
      %p455 = por %p453, %p454
      %p456 = scmp.ne.s32.totalorder %s448, %s450
      %p457 = scmp.eq.s32.totalorder %s36, 1
      %p458 = por %p456, %p457
      %p459 = scmp.ne.s32.totalorder %s450, %s451
      %p460 = scmp.eq.s32.totalorder %s36, 0
      %p461 = por %p459, %p460
      %p462 = scmp.ne.s32.totalorder %s450, %s451
      %p463 = scmp.eq.s32.totalorder %s37, 1
      %p464 = por %p462, %p463
      %p466 = scmp.ne.s32.totalorder %s451, %s465
      %p467 = scmp.eq.s32.totalorder %s37, 0
      %p468 = por %p466, %p467
      %s470 = sadd.s32 %s469, 1
      %p473 = scmp.eq.s32.totalorder %s31, 1
      %p474 = scmp.ne.s32.totalorder %s469, %s471
      %p475 = scmp.eq.s32.totalorder %s31, 0
      %p476 = por %p474, %p475
      %p477 = scmp.ne.s32.totalorder %s469, %s471
      %p478 = scmp.eq.s32.totalorder %s36, 1
      %p479 = por %p477, %p478
      %p480 = scmp.ne.s32.totalorder %s471, %s472
      %p481 = scmp.eq.s32.totalorder %s36, 0
      %p482 = por %p480, %p481
      %p483 = scmp.ne.s32.totalorder %s471, %s472
      %p484 = scmp.eq.s32.totalorder %s37, 1
      %p485 = por %p483, %p484
      %p487 = scmp.ne.s32.totalorder %s472, %s486
      %p488 = scmp.eq.s32.totalorder %s37, 0
      %p489 = por %p487, %p488
      %s491 = sadd.s32 %s490, 1
      %p494 = scmp.eq.s32.totalorder %s31, 1
      %p495 = scmp.ne.s32.totalorder %s490, %s492
      %p496 = scmp.eq.s32.totalorder %s31, 0
      %p497 = por %p495, %p496
      %p498 = scmp.ne.s32.totalorder %s490, %s492
      %p499 = scmp.eq.s32.totalorder %s36, 1
      %p500 = por %p498, %p499
      %p501 = scmp.ne.s32.totalorder %s492, %s493
      %p502 = scmp.eq.s32.totalorder %s36, 0
      %p503 = por %p501, %p502
      %p504 = scmp.ne.s32.totalorder %s492, %s493
      %p505 = scmp.eq.s32.totalorder %s37, 1
      %p506 = por %p504, %p505
      %p508 = scmp.ne.s32.totalorder %s493, %s507
      %p509 = scmp.eq.s32.totalorder %s37, 0
      %p510 = por %p508, %p509
      %s511 = ssub.s32 %s31, %s38
      %p512 = scmp.eq.s32.totalorder %s511, 0
      %s514 = sadd.s32 %s513, 1
      %s515 = scalar_select %p512, %s513, %s514
      %p518 = pneg %p512
      %p519 = scmp.eq.s32.totalorder %s31, 1
      %p520 = por %p518, %p519
      %p521 = scmp.ne.s32.totalorder %s513, %s516
      %p522 = scmp.eq.s32.totalorder %s31, 0
      %p523 = por %p521, %p522
      %p524 = scmp.ne.s32.totalorder %s513, %s516
      %p525 = scmp.eq.s32.totalorder %s36, 1
      %p526 = por %p524, %p525
      %p527 = scmp.ne.s32.totalorder %s516, %s517
      %p528 = scmp.eq.s32.totalorder %s36, 0
      %p529 = por %p527, %p528
      %p530 = scmp.ne.s32.totalorder %s516, %s517
      %p531 = scmp.eq.s32.totalorder %s37, 1
      %p532 = por %p530, %p531
      %p534 = scmp.ne.s32.totalorder %s517, %s533
      %p535 = scmp.eq.s32.totalorder %s37, 0
      %p536 = por %p534, %p535
      %p537 = scmp.le.s32.totalorder 1, %s31
      %p538 = scmp.lt.s32.totalorder %s31, 3
      %p539 = pnand %p537, %p538
      %p540 = pneg %p539
      // Predicated region
      $region9: #{transformer_decoder_layer.1} parent=5 // pred_check
        _
      $region10: #{transformer_decoder_layer.1} parent=5 // pred_check_branch
        %542 = sbr.rel (%p539) target = $region12
      $region11: #{transformer_decoder_layer.1} parent=5 // pred_region
        %s543 = ssub.s32 %s31, 1
        // Predicated region
        $region13: #{transformer_decoder_layer.1} parent=11 // pred_check
          %p544 = pneg %p104
        $region14: #{transformer_decoder_layer.1} parent=11 // pred_check_branch
          %546 = sbr.rel (%p544) target = $region16
        $region15: #{transformer_decoder_layer.1} parent=11 // pred_region
          _
        $region16: #{transformer_decoder_layer.1} parent=11 // pred_fallthru
          _
        // Predicated region
        $region17: #{transformer_decoder_layer.1} parent=11 // pred_check
          %p547 = pneg %p125
        $region18: #{transformer_decoder_layer.1} parent=11 // pred_check_branch
          %549 = sbr.rel (%p547) target = $region20
        $region19: #{transformer_decoder_layer.1} parent=11 // pred_region
          _
        $region20: #{transformer_decoder_layer.1} parent=11 // pred_fallthru
          _
        // Predicated region
        $region21: #{transformer_decoder_layer.1} parent=11 // pred_check
          %p550 = pneg %p146
        $region22: #{transformer_decoder_layer.1} parent=11 // pred_check_branch
          %552 = sbr.rel (%p550) target = $region24
        $region23: #{transformer_decoder_layer.1} parent=11 // pred_region
          _
        $region24: #{transformer_decoder_layer.1} parent=11 // pred_fallthru
          _
        // Predicated region
        $region25: #{transformer_decoder_layer.1} parent=11 // pred_check
          %p553 = pneg %p167
        $region26: #{transformer_decoder_layer.1} parent=11 // pred_check_branch
          %555 = sbr.rel (%p553) target = $region28
        $region27: #{transformer_decoder_layer.1} parent=11 // pred_region
          _
        $region28: #{transformer_decoder_layer.1} parent=11 // pred_fallthru
          _
        // Predicated region
        $region29: #{transformer_decoder_layer.1} parent=11 // pred_check
          %p556 = pneg %p188
        $region30: #{transformer_decoder_layer.1} parent=11 // pred_check_branch
          %558 = sbr.rel (%p556) target = $region32
        $region31: #{transformer_decoder_layer.1} parent=11 // pred_region
          _
        $region32: #{transformer_decoder_layer.1} parent=11 // pred_fallthru
          _
        // Predicated region
        $region33: #{transformer_decoder_layer.1} parent=11 // pred_check
          %p559 = pneg %p209
        $region34: #{transformer_decoder_layer.1} parent=11 // pred_check_branch
          %561 = sbr.rel (%p559) target = $region36
        $region35: #{transformer_decoder_layer.1} parent=11 // pred_region
          _
        $region36: #{transformer_decoder_layer.1} parent=11 // pred_fallthru
          _
        // Predicated region
        $region37: #{transformer_decoder_layer.1} parent=11 // pred_check
          %p562 = pneg %p230
        $region38: #{transformer_decoder_layer.1} parent=11 // pred_check_branch
          %564 = sbr.rel (%p562) target = $region40
        $region39: #{transformer_decoder_layer.1} parent=11 // pred_region
          _
        $region40: #{transformer_decoder_layer.1} parent=11 // pred_fallthru
          _
        // Predicated region
        $region41: #{transformer_decoder_layer.1} parent=11 // pred_check
          %p565 = pneg %p251
        $region42: #{transformer_decoder_layer.1} parent=11 // pred_check_branch
          %567 = sbr.rel (%p565) target = $region44
        $region43: #{transformer_decoder_layer.1} parent=11 // pred_region
          _
        $region44: #{transformer_decoder_layer.1} parent=11 // pred_fallthru
          _
        // Predicated region
        $region45: #{transformer_decoder_layer.1} parent=11 // pred_check
          %p568 = pneg %p272
        $region46: #{transformer_decoder_layer.1} parent=11 // pred_check_branch
          %570 = sbr.rel (%p568) target = $region48
        $region47: #{transformer_decoder_layer.1} parent=11 // pred_region
          _
        $region48: #{transformer_decoder_layer.1} parent=11 // pred_fallthru
          _
        // Predicated region
        $region49: #{transformer_decoder_layer.1} parent=11 // pred_check
          %p571 = pneg %p293
        $region50: #{transformer_decoder_layer.1} parent=11 // pred_check_branch
          %573 = sbr.rel (%p571) target = $region52
        $region51: #{transformer_decoder_layer.1} parent=11 // pred_region
          _
        $region52: #{transformer_decoder_layer.1} parent=11 // pred_fallthru
          _
        // Predicated region
        $region53: #{transformer_decoder_layer.1} parent=11 // pred_check
          %p574 = pneg %p314
        $region54: #{transformer_decoder_layer.1} parent=11 // pred_check_branch
          %576 = sbr.rel (%p574) target = $region56
        $region55: #{transformer_decoder_layer.1} parent=11 // pred_region
          _
        $region56: #{transformer_decoder_layer.1} parent=11 // pred_fallthru
          _
        // Predicated region
        $region57: #{transformer_decoder_layer.1} parent=11 // pred_check
          %p577 = pneg %p335
        $region58: #{transformer_decoder_layer.1} parent=11 // pred_check_branch
          %579 = sbr.rel (%p577) target = $region60
        $region59: #{transformer_decoder_layer.1} parent=11 // pred_region
          _
        $region60: #{transformer_decoder_layer.1} parent=11 // pred_fallthru
          _
        // Predicated region
        $region61: #{transformer_decoder_layer.1} parent=11 // pred_check
          %p580 = pneg %p356
        $region62: #{transformer_decoder_layer.1} parent=11 // pred_check_branch
          %582 = sbr.rel (%p580) target = $region64
        $region63: #{transformer_decoder_layer.1} parent=11 // pred_region
          _
        $region64: #{transformer_decoder_layer.1} parent=11 // pred_fallthru
          _
        // Predicated region
        $region65: #{transformer_decoder_layer.1} parent=11 // pred_check
          %p583 = pneg %p377
        $region66: #{transformer_decoder_layer.1} parent=11 // pred_check_branch
          %585 = sbr.rel (%p583) target = $region68
        $region67: #{transformer_decoder_layer.1} parent=11 // pred_region
          _
        $region68: #{transformer_decoder_layer.1} parent=11 // pred_fallthru
          _
        // Predicated region
        $region69: #{transformer_decoder_layer.1} parent=11 // pred_check
          %p586 = pneg %p398
        $region70: #{transformer_decoder_layer.1} parent=11 // pred_check_branch
          %588 = sbr.rel (%p586) target = $region72
        $region71: #{transformer_decoder_layer.1} parent=11 // pred_region
          _
        $region72: #{transformer_decoder_layer.1} parent=11 // pred_fallthru
          _
        // Predicated region
        $region73: #{transformer_decoder_layer.1} parent=11 // pred_check
          %p589 = pneg %p419
        $region74: #{transformer_decoder_layer.1} parent=11 // pred_check_branch
          %591 = sbr.rel (%p589) target = $region76
        $region75: #{transformer_decoder_layer.1} parent=11 // pred_region
          _
        $region76: #{transformer_decoder_layer.1} parent=11 // pred_fallthru
          _
        // Predicated region
        $region77: #{transformer_decoder_layer.1} parent=11 // pred_check
          %p592 = pneg %p440
        $region78: #{transformer_decoder_layer.1} parent=11 // pred_check_branch
          %594 = sbr.rel (%p592) target = $region80
        $region79: #{transformer_decoder_layer.1} parent=11 // pred_region
          _
        $region80: #{transformer_decoder_layer.1} parent=11 // pred_fallthru
          _
        // Predicated region
        $region81: #{transformer_decoder_layer.1} parent=11 // pred_check
          %p595 = pneg %p461
        $region82: #{transformer_decoder_layer.1} parent=11 // pred_check_branch
          %597 = sbr.rel (%p595) target = $region84
        $region83: #{transformer_decoder_layer.1} parent=11 // pred_region
          _
        $region84: #{transformer_decoder_layer.1} parent=11 // pred_fallthru
          _
        // Predicated region
        $region85: #{transformer_decoder_layer.1} parent=11 // pred_check
          %p598 = pneg %p482
        $region86: #{transformer_decoder_layer.1} parent=11 // pred_check_branch
          %600 = sbr.rel (%p598) target = $region88
        $region87: #{transformer_decoder_layer.1} parent=11 // pred_region
          _
        $region88: #{transformer_decoder_layer.1} parent=11 // pred_fallthru
          _
        // Predicated region
        $region89: #{transformer_decoder_layer.1} parent=11 // pred_check
          %p601 = pneg %p503
        $region90: #{transformer_decoder_layer.1} parent=11 // pred_check_branch
          %603 = sbr.rel (%p601) target = $region92
        $region91: #{transformer_decoder_layer.1} parent=11 // pred_region
          _
        $region92: #{transformer_decoder_layer.1} parent=11 // pred_fallthru
          _
      $region12: #{transformer_decoder_layer.1} parent=5 // pred_fallthru
        _
      %p604 = scmp.lt.s32.totalorder %s31, 2
      // Predicated region
      $region93: #{transformer_decoder_layer.1} parent=5 // pred_check
        %p605 = pneg %p604
      $region94: #{transformer_decoder_layer.1} parent=5 // pred_check_branch
        %607 = sbr.rel (%p605) target = $region96
      $region95: #{transformer_decoder_layer.1} parent=5 // pred_region
        // Predicated region
        $region97: #{transformer_decoder_layer.1} parent=95 // pred_check
          %p608 = pneg %p51
        $region98: #{transformer_decoder_layer.1} parent=95 // pred_check_branch
          %610 = sbr.rel (%p608) target = $region100
        $region99: #{transformer_decoder_layer.1} parent=95 // pred_region
          %p611 = scmp.lt.s32.totalorder %s31, 1
          %s612 = scalar_select %p611, %s31, 1
          %s613 = smul.addr %s612, 8
          %s614 = scalar_lea.vmem %s0, %s613
        $region100: #{transformer_decoder_layer.1} parent=95 // pred_fallthru
          _
        // Predicated region
        $region101: #{transformer_decoder_layer.1} parent=95 // pred_check
          %p615 = pneg %p77
        $region102: #{transformer_decoder_layer.1} parent=95 // pred_check_branch
          %617 = sbr.rel (%p615) target = $region104
        $region103: #{transformer_decoder_layer.1} parent=95 // pred_region
          %p618 = scmp.lt.s32.totalorder %s31, 1
          %s619 = scalar_select %p618, %s31, 1
          %s620 = smul.addr %s619, 2
          %s621 = smul.addr %s620, 8
          %s622 = scalar_lea.vmem %s1, %s621
        $region104: #{transformer_decoder_layer.1} parent=95 // pred_fallthru
          _
      $region96: #{transformer_decoder_layer.1} parent=5 // pred_fallthru
        _
      %p623 = scmp.le.s32.totalorder 1, %s31
      %p624 = scmp.lt.s32.totalorder %s31, 3
      %p625 = pnand %p623, %p624
      %p626 = pneg %p625
      // Predicated region
      $region105: #{transformer_decoder_layer.1} parent=5 // pred_check
        _
      $region106: #{transformer_decoder_layer.1} parent=5 // pred_check_branch
        %628 = sbr.rel (%p625) target = $region108
      $region107: #{transformer_decoder_layer.1} parent=5 // pred_region
        %s629 = ssub.s32 %s31, 1
        %p630 = scmp.lt.s32.totalorder %s36, 1
        %s631 = scalar_select %p630, %s36, 1
        %s632 = smul.addr %s631, 8
        %s633 = scalar_lea.vmem %s0, %s632
        %p634 = pneg %p57
        %p635 = pneg %p54
        %p636 = scmp.lt.s32.totalorder %s36, 1
        %s637 = scalar_select %p636, %s36, 1
        %s638 = smul.addr %s637, 2
        %s639 = smul.addr %s638, 8
        %s640 = scalar_lea.vmem %s1, %s639
        %p641 = pneg %p83
        %p642 = pneg %p80
        %p643 = pneg %p104
        %p644 = pneg %p101
        %p645 = pneg %p125
        %p646 = pneg %p122
        %p647 = pneg %p146
        %p648 = pneg %p143
        %p649 = pneg %p167
        %p650 = pneg %p164
        %p651 = pneg %p188
        %p652 = pneg %p185
        %p653 = pneg %p209
        %p654 = pneg %p206
        %p655 = pneg %p230
        %p656 = pneg %p227
        %p657 = pneg %p251
        %p658 = pneg %p248
        %p659 = pneg %p272
        %p660 = pneg %p269
        %p661 = pneg %p293
        %p662 = pneg %p290
        %p663 = pneg %p314
        %p664 = pneg %p311
        %p665 = pneg %p335
        %p666 = pneg %p332
        %p667 = pneg %p356
        %p668 = pneg %p353
        %p669 = pneg %p377
        %p670 = pneg %p374
        %p671 = pneg %p398
        %p672 = pneg %p395
        %p673 = pneg %p419
        %p674 = pneg %p416
        %p675 = pneg %p440
        %p676 = pneg %p437
        %p677 = pneg %p461
        %p678 = pneg %p458
        %p679 = pneg %p482
        %p680 = pneg %p479
        %p681 = pneg %p503
        %p682 = pneg %p500
        %p683 = pneg %p529
        %p684 = pneg %p526
        %s685 = sand.u32 %s516, 1
        %s686 = scalar_lea.sflag [#allocation3], %s685
        %s687 = sand.u32 %s516, 1
        %s688 = smul.addr %s687, 8
        %s689 = scalar_lea.vmem [#allocation2], %s688
        %p690 = scmp.lt.s32.totalorder %s36, 1
        %s691 = scalar_select %p690, %s36, 1
        %s692 = smul.addr %s691, 8
        %s693 = scalar_lea.vmem %s0, %s692
        %p694 = scmp.lt.s32.totalorder %s36, 1
        %s695 = scalar_select %p694, %s36, 1
        %s696 = smul.addr %s695, 2
        %s697 = smul.addr %s696, 8
        %s698 = scalar_lea.vmem %s1, %s697
        %v699 = vld [vmem:[%s693] sm:$0xff]
        %v700 = vld [vmem:[%s698] sm:$0xff]
        %v701 = vld [vmem:[%s698 + $0x8] sm:$0xff]
        %v702 = vld [vmem:[%s2] sm:$0xff]
        %v703 = vld [vmem:[%s2 + $0x8] sm:$0xff]
        %v704 = vld [vmem:[%s2 + $0x10] sm:$0xff]
        %v705 = vld [vmem:[%s2 + $0x18] sm:$0xff]
        %v706 = vld [vmem:[%s3] sm:$0x1]
        %v708 = vperm.slane %v706, 0
        %vm710 = vcmask 261120
        %v712 = vsel %vm710, %v699, 0
        %714 = vmatpush.msra.mxu0 0.0
        %715 = vmatpush.msra.mxu0 0.0
        %716 = vmatpush.msra.mxu0 0.0
        %717 = vmatpush.msra.mxu0 0.0
        %718 = vmatpush.msra.mxu0 0.0
        %719 = vmatpush.msra.mxu0 0.0
        %720 = vmatpush.msra.mxu0 0.0
        %721 = vmatpush.msra.mxu0 0.0
        %722 = vmatpush.msra.mxu0 0.0
        %723 = vmatpush.msra.mxu0 0.0
        %724 = vmatpush.msra.mxu0 0.0
        %725 = vmatpush.msra.mxu0 0.0
        %726 = vmatpush.msra.mxu0 %v705
        %727 = vmatpush.msra.mxu0 %v704
        %728 = vmatpush.msra.mxu0 %v703
        %729 = vmatpush.msra.mxu0 %v702
        %730 = vmatmul.f32.gmra.mxu0 %v712
        %v731 = vpop.f32.mrf.mxu0
        %v732 = vadd.f32 %v708, %v731
        %733 = vdwg.mxu0
        %735 = vrot.lane.b32.xlu0 %v732, 120
        %v736 = vpop.permute.xlu0 %735
        %737 = vrot.lane.b32.xlu0 %v732, 112
        %v738 = vpop.permute.xlu0 %737
        %739 = vrot.lane.b32.xlu0 %v732, 104
        %v740 = vpop.permute.xlu0 %739
        %741 = vrot.lane.b32.xlu0 %v732, 96
        %v742 = vpop.permute.xlu0 %741
        %vm743 = vcmask 64512
        %v744 = vsel %vm743, %v732, 0
        %v746 = vsel %vm743, %v742, 0
        %748 = vmatpush.xpose.msra.mxu0 0.0
        %749 = vmatpush.xpose.msra.mxu0 0.0
        %750 = vmatpush.xpose.msra.mxu0 0.0
        %751 = vmatpush.xpose.msra.mxu0 0.0
        %752 = vmatpush.xpose.msra.mxu0 0.0
        %753 = vmatpush.xpose.msra.mxu0 0.0
        %754 = vmatpush.xpose.msra.mxu0 0.0
        %755 = vmatpush.xpose.msra.mxu0 0.0
        %756 = vmatpush.xpose.msra.mxu0 0.0
        %757 = vmatpush.xpose.msra.mxu0 0.0
        %758 = vmatpush.xpose.msra.mxu0 0.0
        %759 = vmatpush.xpose.msra.mxu0 0.0
        %760 = vmatpush.xpose.msra.mxu0 0.0
        %761 = vmatpush.xpose.msra.mxu0 0.0
        %762 = vmatpush.xpose.msra.mxu0 0.0
        %763 = vmatpush.xpose.msra.mxu0 %v746
        %764 = vmatmul.f32.gmra.mxu0 %v744
        %v765 = vpop.f32.mrf.mxu0
        %v766 = vadd.f32 0.0, %v765
        %767 = vdwg.mxu0
        %768 = vrot.lane.b32.xlu0 %v736, 96
        %v769 = vpop.permute.xlu0 %768
        %v770 = vsel %vm743, %v736, 0
        %v772 = vsel %vm743, %v769, 0
        %774 = vmatpush.xpose.msra.mxu0 0.0
        %775 = vmatpush.xpose.msra.mxu0 0.0
        %776 = vmatpush.xpose.msra.mxu0 0.0
        %777 = vmatpush.xpose.msra.mxu0 0.0
        %778 = vmatpush.xpose.msra.mxu0 0.0
        %779 = vmatpush.xpose.msra.mxu0 0.0
        %780 = vmatpush.xpose.msra.mxu0 0.0
        %781 = vmatpush.xpose.msra.mxu0 0.0
        %782 = vmatpush.xpose.msra.mxu0 0.0
        %783 = vmatpush.xpose.msra.mxu0 0.0
        %784 = vmatpush.xpose.msra.mxu0 0.0
        %785 = vmatpush.xpose.msra.mxu0 0.0
        %786 = vmatpush.xpose.msra.mxu0 0.0
        %787 = vmatpush.xpose.msra.mxu0 0.0
        %788 = vmatpush.xpose.msra.mxu0 0.0
        %789 = vmatpush.xpose.msra.mxu0 %v772
        %790 = vmatmul.f32.gmra.mxu0 %v770
        %v791 = vpop.f32.mrf.mxu0
        %v792 = vadd.f32 0.0, %v791
        %793 = vdwg.mxu0
        %794 = vrot.lane.b32.xlu0 %v738, 96
        %v795 = vpop.permute.xlu0 %794
        %v796 = vsel %vm743, %v738, 0
        %v798 = vsel %vm743, %v795, 0
        %800 = vmatpush.xpose.msra.mxu0 0.0
        %801 = vmatpush.xpose.msra.mxu0 0.0
        %802 = vmatpush.xpose.msra.mxu0 0.0
        %803 = vmatpush.xpose.msra.mxu0 0.0
        %804 = vmatpush.xpose.msra.mxu0 0.0
        %805 = vmatpush.xpose.msra.mxu0 0.0
        %806 = vmatpush.xpose.msra.mxu0 0.0
        %807 = vmatpush.xpose.msra.mxu0 0.0
        %808 = vmatpush.xpose.msra.mxu0 0.0
        %809 = vmatpush.xpose.msra.mxu0 0.0
        %810 = vmatpush.xpose.msra.mxu0 0.0
        %811 = vmatpush.xpose.msra.mxu0 0.0
        %812 = vmatpush.xpose.msra.mxu0 0.0
        %813 = vmatpush.xpose.msra.mxu0 0.0
        %814 = vmatpush.xpose.msra.mxu0 0.0
        %815 = vmatpush.xpose.msra.mxu0 %v798
        %816 = vmatmul.f32.gmra.mxu0 %v796
        %v817 = vpop.f32.mrf.mxu0
        %v818 = vadd.f32 0.0, %v817
        %819 = vdwg.mxu0
        %820 = vrot.lane.b32.xlu0 %v740, 96
        %v821 = vpop.permute.xlu0 %820
        %v822 = vsel %vm743, %v740, 0
        %v824 = vsel %vm743, %v821, 0
        %826 = vmatpush.xpose.msra.mxu0 0.0
        %827 = vmatpush.xpose.msra.mxu0 0.0
        %828 = vmatpush.xpose.msra.mxu0 0.0
        %829 = vmatpush.xpose.msra.mxu0 0.0
        %830 = vmatpush.xpose.msra.mxu0 0.0
        %831 = vmatpush.xpose.msra.mxu0 0.0
        %832 = vmatpush.xpose.msra.mxu0 0.0
        %833 = vmatpush.xpose.msra.mxu0 0.0
        %834 = vmatpush.xpose.msra.mxu0 0.0
        %835 = vmatpush.xpose.msra.mxu0 0.0
        %836 = vmatpush.xpose.msra.mxu0 0.0
        %837 = vmatpush.xpose.msra.mxu0 0.0
        %838 = vmatpush.xpose.msra.mxu0 0.0
        %839 = vmatpush.xpose.msra.mxu0 0.0
        %840 = vmatpush.xpose.msra.mxu0 0.0
        %841 = vmatpush.xpose.msra.mxu0 %v824
        %842 = vmatmul.f32.gmra.mxu0 %v822
        %v843 = vpop.f32.mrf.mxu0
        %v844 = vadd.f32 0.0, %v843
        %845 = vdwg.mxu0
        %v846 = vmul.f32 %v766, 0.35355338
        %v847 = vmul.f32 %v792, 0.35355338
        %v848 = vmul.f32 %v818, 0.35355338
        %v849 = vmul.f32 %v844, 0.35355338
        %v850 = vsel %vm743, %v846, -inf
        %851 = vmax.xlane.f32.xlu0 %v850
        %v852 = vpop.xlane.xlu0 %851
        %v853 = vsel %vm743, %v847, -inf
        %854 = vmax.xlane.f32.xlu0 %v853
        %v855 = vpop.xlane.xlu0 %854
        %v856 = vsel %vm743, %v848, -inf
        %857 = vmax.xlane.f32.xlu0 %v856
        %v858 = vpop.xlane.xlu0 %857
        %v859 = vsel %vm743, %v849, -inf
        %860 = vmax.xlane.f32.xlu0 %v859
        %v861 = vpop.xlane.xlu0 %860
        %v862 = vsub.f32 %v846, %v852
        %v863 = vsub.f32 %v847, %v855
        %v864 = vsub.f32 %v848, %v858
        %v865 = vsub.f32 %v849, %v861
        %v866 = vmul.f32 %v862, 1.442695
        %v867 = vpow.pop %v866
        %v868 = vmul.f32 %v863, 1.442695
        %v869 = vpow.pop %v868
        %v870 = vmul.f32 %v864, 1.442695
        %v871 = vpow.pop %v870
        %v872 = vmul.f32 %v865, 1.442695
        %v873 = vpow.pop %v872
        %v874 = vsel %vm743, %v867, 0.0
        %875 = vadd.xlane.f32.xlu0 %v874
        %v876 = vpop.xlane.xlu0 %875
        %v877 = vsel %vm743, %v869, 0.0
        %878 = vadd.xlane.f32.xlu0 %v877
        %v879 = vpop.xlane.xlu0 %878
        %v880 = vsel %vm743, %v871, 0.0
        %881 = vadd.xlane.f32.xlu0 %v880
        %v882 = vpop.xlane.xlu0 %881
        %v883 = vsel %vm743, %v873, 0.0
        %884 = vadd.xlane.f32.xlu0 %v883
        %v885 = vpop.xlane.xlu0 %884
        %v886 = vrcp.pop %v876
        %v887 = vmul.f32 %v876, %v886
        %v888 = vsub.f32 1.0, %v887
        %v889 = vmul.f32 %v886, %v888
        %v890 = vadd.f32 %v886, %v889
        %vm891 = vweird.f32 %v876
        %vm892 = vweird.f32 %v886
        %vm893 = vmor %vm891, %vm892
        %v894 = vsel %vm893, %v886, %v890
        %v895 = vand.u32 2147483647, %v876
        %vm896 = vcmp.eq.f32.partialorder %v895, 8.507059e+37
        %v897 = vand.u32 %v876, 2147483648
        %v898 = vor.u32 1.1754944e-38, %v897
        %v899 = vsel %vm896, %v898, %v894
        %v900 = vmul.f32 %v867, %v899
        %v901 = vrcp.pop %v879
        %v902 = vmul.f32 %v879, %v901
        %v903 = vsub.f32 1.0, %v902
        %v904 = vmul.f32 %v901, %v903
        %v905 = vadd.f32 %v901, %v904
        %vm906 = vweird.f32 %v879
        %vm907 = vweird.f32 %v901
        %vm908 = vmor %vm906, %vm907
        %v909 = vsel %vm908, %v901, %v905
        %v910 = vand.u32 2147483647, %v879
        %vm911 = vcmp.eq.f32.partialorder %v910, 8.507059e+37
        %v912 = vand.u32 %v879, 2147483648
        %v913 = vor.u32 1.1754944e-38, %v912
        %v914 = vsel %vm911, %v913, %v909
        %v915 = vmul.f32 %v869, %v914
        %v916 = vrcp.pop %v882
        %v917 = vmul.f32 %v882, %v916
        %v918 = vsub.f32 1.0, %v917
        %v919 = vmul.f32 %v916, %v918
        %v920 = vadd.f32 %v916, %v919
        %vm921 = vweird.f32 %v882
        %vm922 = vweird.f32 %v916
        %vm923 = vmor %vm921, %vm922
        %v924 = vsel %vm923, %v916, %v920
        %v925 = vand.u32 2147483647, %v882
        %vm926 = vcmp.eq.f32.partialorder %v925, 8.507059e+37
        %v927 = vand.u32 %v882, 2147483648
        %v928 = vor.u32 1.1754944e-38, %v927
        %v929 = vsel %vm926, %v928, %v924
        %v930 = vmul.f32 %v871, %v929
        %v931 = vrcp.pop %v885
        %v932 = vmul.f32 %v885, %v931
        %v933 = vsub.f32 1.0, %v932
        %v934 = vmul.f32 %v931, %v933
        %v935 = vadd.f32 %v931, %v934
        %vm936 = vweird.f32 %v885
        %vm937 = vweird.f32 %v931
        %vm938 = vmor %vm936, %vm937
        %v939 = vsel %vm938, %v931, %v935
        %v940 = vand.u32 2147483647, %v885
        %vm941 = vcmp.eq.f32.partialorder %v940, 8.507059e+37
        %v942 = vand.u32 %v885, 2147483648
        %v943 = vor.u32 1.1754944e-38, %v942
        %v944 = vsel %vm941, %v943, %v939
        %v945 = vmul.f32 %v873, %v944
        %946 = vrot.lane.b32.xlu0 %v732, 64
        %v947 = vpop.permute.xlu0 %946
        %v950 = vsel %vm743, %v900, 0
        %952 = vmatpush.msra.mxu0 0.0
        %953 = vmatpush.msra.mxu0 0.0
        %954 = vmatpush.msra.mxu0 0.0
        %955 = vmatpush.msra.mxu0 0.0
        %956 = vmatpush.msra.mxu0 0.0
        %957 = vmatpush.msra.mxu0 0.0
        %958 = vmatpush.msra.mxu0 0.0
        %959 = vmatpush.msra.mxu0 0.0
        %960 = vmatpush.msra.mxu0 0.0
        %961 = vmatpush.msra.mxu0 0.0
        %962 = vmatpush.msra.mxu0 0.0
        %963 = vmatpush.msra.mxu0 0.0
        %964 = vmatpush.msra.mxu0 0.0
        %965 = vmatpush.msra.mxu0 0.0
        %966 = vmatpush.msra.mxu0 0.0
        %967 = vmatpush.msra.mxu0 %v947
        %968 = vmatmul.f32.gmra.mxu0 %v950
        %v969 = vpop.f32.mrf.mxu0
        %v970 = vadd.f32 0.0, %v969
        %971 = vdwg.mxu0
        %972 = vrot.lane.b32.xlu0 %v736, 64
        %v973 = vpop.permute.xlu0 %972
        %v976 = vsel %vm743, %v915, 0
        %978 = vmatpush.msra.mxu0 0.0
        %979 = vmatpush.msra.mxu0 0.0
        %980 = vmatpush.msra.mxu0 0.0
        %981 = vmatpush.msra.mxu0 0.0
        %982 = vmatpush.msra.mxu0 0.0
        %983 = vmatpush.msra.mxu0 0.0
        %984 = vmatpush.msra.mxu0 0.0
        %985 = vmatpush.msra.mxu0 0.0
        %986 = vmatpush.msra.mxu0 0.0
        %987 = vmatpush.msra.mxu0 0.0
        %988 = vmatpush.msra.mxu0 0.0
        %989 = vmatpush.msra.mxu0 0.0
        %990 = vmatpush.msra.mxu0 0.0
        %991 = vmatpush.msra.mxu0 0.0
        %992 = vmatpush.msra.mxu0 0.0
        %993 = vmatpush.msra.mxu0 %v973
        %994 = vmatmul.f32.gmra.mxu0 %v976
        %v995 = vpop.f32.mrf.mxu0
        %v996 = vadd.f32 0.0, %v995
        %997 = vdwg.mxu0
        %998 = vrot.lane.b32.xlu0 %v738, 64
        %v999 = vpop.permute.xlu0 %998
        %v1002 = vsel %vm743, %v930, 0
        %1004 = vmatpush.msra.mxu0 0.0
        %1005 = vmatpush.msra.mxu0 0.0
        %1006 = vmatpush.msra.mxu0 0.0
        %1007 = vmatpush.msra.mxu0 0.0
        %1008 = vmatpush.msra.mxu0 0.0
        %1009 = vmatpush.msra.mxu0 0.0
        %1010 = vmatpush.msra.mxu0 0.0
        %1011 = vmatpush.msra.mxu0 0.0
        %1012 = vmatpush.msra.mxu0 0.0
        %1013 = vmatpush.msra.mxu0 0.0
        %1014 = vmatpush.msra.mxu0 0.0
        %1015 = vmatpush.msra.mxu0 0.0
        %1016 = vmatpush.msra.mxu0 0.0
        %1017 = vmatpush.msra.mxu0 0.0
        %1018 = vmatpush.msra.mxu0 0.0
        %1019 = vmatpush.msra.mxu0 %v999
        %1020 = vmatmul.f32.gmra.mxu0 %v1002
        %v1021 = vpop.f32.mrf.mxu0
        %v1022 = vadd.f32 0.0, %v1021
        %1023 = vdwg.mxu0
        %1024 = vrot.lane.b32.xlu0 %v740, 64
        %v1025 = vpop.permute.xlu0 %1024
        %v1028 = vsel %vm743, %v945, 0
        %1030 = vmatpush.msra.mxu0 0.0
        %1031 = vmatpush.msra.mxu0 0.0
        %1032 = vmatpush.msra.mxu0 0.0
        %1033 = vmatpush.msra.mxu0 0.0
        %1034 = vmatpush.msra.mxu0 0.0
        %1035 = vmatpush.msra.mxu0 0.0
        %1036 = vmatpush.msra.mxu0 0.0
        %1037 = vmatpush.msra.mxu0 0.0
        %1038 = vmatpush.msra.mxu0 0.0
        %1039 = vmatpush.msra.mxu0 0.0
        %1040 = vmatpush.msra.mxu0 0.0
        %1041 = vmatpush.msra.mxu0 0.0
        %1042 = vmatpush.msra.mxu0 0.0
        %1043 = vmatpush.msra.mxu0 0.0
        %1044 = vmatpush.msra.mxu0 0.0
        %1045 = vmatpush.msra.mxu0 %v1025
        %1046 = vmatmul.f32.gmra.mxu0 %v1028
        %v1047 = vpop.f32.mrf.mxu0
        %v1048 = vadd.f32 0.0, %v1047
        %1049 = vdwg.mxu0
        %1051 = vrot.lane.b32.xlu0 %v996, 8
        %v1052 = vpop.permute.xlu0 %1051
        %1055 = vrot.lane.b32.xlu0 %v1022, 16
        %v1056 = vpop.permute.xlu0 %1055
        %1059 = vrot.lane.b32.xlu0 %v1048, 24
        %v1060 = vpop.permute.xlu0 %1059
        %v1062 = vsel %vm743, %v970, %v1052
        %vm1063 = vcmask 130048
        %v1064 = vsel %vm1063, %v1062, %v1056
        %vm1065 = vcmask 195584
        %v1066 = vsel %vm1065, %v1064, %v1060
        %v1067 = vld [vmem:[%s4] sm:$0xff]
        %v1068 = vld [vmem:[%s4 + $0x8] sm:$0xff]
        %v1069 = vld [vmem:[%s4 + $0x10] sm:$0xff]
        %v1070 = vld [vmem:[%s4 + $0x18] sm:$0xff]
        %v1071 = vld [vmem:[%s5] sm:$0x1]
        %v1073 = vperm.slane %v1071, 0
        %v1076 = vsel %vm710, %v1066, 0
        %1078 = vmatpush.msra.mxu0 0.0
        %1079 = vmatpush.msra.mxu0 0.0
        %1080 = vmatpush.msra.mxu0 0.0
        %1081 = vmatpush.msra.mxu0 0.0
        %1082 = vmatpush.msra.mxu0 0.0
        %1083 = vmatpush.msra.mxu0 0.0
        %1084 = vmatpush.msra.mxu0 0.0
        %1085 = vmatpush.msra.mxu0 0.0
        %1086 = vmatpush.msra.mxu0 0.0
        %1087 = vmatpush.msra.mxu0 0.0
        %1088 = vmatpush.msra.mxu0 0.0
        %1089 = vmatpush.msra.mxu0 0.0
        %1090 = vmatpush.msra.mxu0 %v1070
        %1091 = vmatpush.msra.mxu0 %v1069
        %1092 = vmatpush.msra.mxu0 %v1068
        %1093 = vmatpush.msra.mxu0 %v1067
        %1094 = vmatmul.f32.gmra.mxu0 %v1076
        %v1095 = vpop.f32.mrf.mxu0
        %v1096 = vadd.f32 %v1073, %v1095
        %1097 = vdwg.mxu0
        %v1098 = vadd.f32 %v1096, %v699
        %v1099 = vld [vmem:[%s6] sm:$0x1]
        %v1100 = vld [vmem:[%s7] sm:$0x1]
        %v1101 = vsel %vm710, %v1098, 0.0
        %1102 = vadd.xlane.f32.xlu0 %v1101
        %v1103 = vpop.xlane.xlu0 %1102
        %v1104 = vrcp.pop 32.0
        %v1105 = vmul.f32 32.0, %v1104
        %v1106 = vsub.f32 1.0, %v1105
        %v1107 = vmul.f32 %v1104, %v1106
        %v1108 = vadd.f32 %v1104, %v1107
        %vm1109 = vweird.f32 %v1104
        %v1110 = vsel %vm1109, %v1104, %v1108
        %v1111 = vmul.f32 %v1103, %v1110
        %v1112 = vsub.f32 %v1098, %v1111
        %v1113 = vmul.f32 %v1112, %v1112
        %v1114 = vsel %vm710, %v1113, 0.0
        %1115 = vadd.xlane.f32.xlu0 %v1114
        %v1116 = vpop.xlane.xlu0 %1115
        %v1117 = vmul.f32 %v1116, %v1110
        %v1118 = vadd.f32 %v1117, 1e-05
        %v1119 = vrsqrt.pop %v1118
        %v1120 = vmul.f32 %v1119, %v1118
        %v1121 = vmul.f32 %v1120, %v1119
        %v1122 = vmul.f32 0.5, %v1121
        %v1123 = vsub.f32 1.5, %v1122
        %v1124 = vmul.f32 %v1119, %v1123
        %vm1125 = vweird.f32 %v1118
        %vm1126 = vweird.f32 %v1119
        %vm1127 = vmor %vm1125, %vm1126
        %v1128 = vsel %vm1127, %v1119, %v1124
        %v1129 = vmul.f32 %v1112, %v1128
        %v1131 = vperm.slane %v1099, 0
        %v1133 = vmul.f32 %v1129, %v1131
        %v1135 = vperm.slane %v1100, 0
        %v1137 = vadd.f32 %v1133, %v1135
        %v1138 = vld [vmem:[%s8] sm:$0xff]
        %v1139 = vld [vmem:[%s8 + $0x8] sm:$0xff]
        %v1140 = vld [vmem:[%s8 + $0x10] sm:$0xff]
        %v1141 = vld [vmem:[%s8 + $0x18] sm:$0xff]
        %v1142 = vld [vmem:[%s9] sm:$0x1]
        %v1144 = vperm.slane %v1142, 0
        %v1147 = vsel %vm710, %v1137, 0
        %1149 = vmatpush.msra.mxu0 0.0
        %1150 = vmatpush.msra.mxu0 0.0
        %1151 = vmatpush.msra.mxu0 0.0
        %1152 = vmatpush.msra.mxu0 0.0
        %1153 = vmatpush.msra.mxu0 0.0
        %1154 = vmatpush.msra.mxu0 0.0
        %1155 = vmatpush.msra.mxu0 0.0
        %1156 = vmatpush.msra.mxu0 0.0
        %1157 = vmatpush.msra.mxu0 0.0
        %1158 = vmatpush.msra.mxu0 0.0
        %1159 = vmatpush.msra.mxu0 0.0
        %1160 = vmatpush.msra.mxu0 0.0
        %1161 = vmatpush.msra.mxu0 %v1141
        %1162 = vmatpush.msra.mxu0 %v1140
        %1163 = vmatpush.msra.mxu0 %v1139
        %1164 = vmatpush.msra.mxu0 %v1138
        %1165 = vmatmul.f32.gmra.mxu0 %v1147
        %v1166 = vpop.f32.mrf.mxu0
        %v1167 = vadd.f32 %v1144, %v1166
        %1168 = vdwg.mxu0
        %v1169 = vld [vmem:[%s10] sm:$0xff]
        %v1170 = vld [vmem:[%s10 + $0x8] sm:$0xff]
        %v1171 = vld [vmem:[%s10 + $0x10] sm:$0xff]
        %v1172 = vld [vmem:[%s10 + $0x18] sm:$0xff]
        %v1173 = vld [vmem:[%s11] sm:$0x1]
        %v1175 = vperm.slane %v1173, 0
        %v1178 = vsel %vm710, %v700, 0
        %v1181 = vsel %vm710, %v701, 0
        %1183 = vmatpush.msra.mxu0 0.0
        %1184 = vmatpush.msra.mxu0 0.0
        %1185 = vmatpush.msra.mxu0 0.0
        %1186 = vmatpush.msra.mxu0 0.0
        %1187 = vmatpush.msra.mxu0 0.0
        %1188 = vmatpush.msra.mxu0 0.0
        %1189 = vmatpush.msra.mxu0 0.0
        %1190 = vmatpush.msra.mxu0 0.0
        %1191 = vmatpush.msra.mxu0 0.0
        %1192 = vmatpush.msra.mxu0 0.0
        %1193 = vmatpush.msra.mxu0 0.0
        %1194 = vmatpush.msra.mxu0 0.0
        %1195 = vmatpush.msra.mxu0 %v1172
        %1196 = vmatpush.msra.mxu0 %v1171
        %1197 = vmatpush.msra.mxu0 %v1170
        %1198 = vmatpush.msra.mxu0 %v1169
        %1199 = vmatmul.f32.gmra.mxu0 %v1178
        %v1200 = vpop.f32.mrf.mxu0
        %v1201 = vadd.f32 %v1175, %v1200
        %1202 = vmatmul.f32.gmra.mxu0 %v1181
        %v1203 = vpop.f32.mrf.mxu0
        %v1204 = vadd.f32 %v1175, %v1203
        %1205 = vdwg.mxu0
        %1207 = vrot.lane.b32.xlu0 %v1167, 120
        %v1208 = vpop.permute.xlu0 %1207
        %1209 = vrot.lane.b32.xlu0 %v1167, 112
        %v1210 = vpop.permute.xlu0 %1209
        %1211 = vrot.lane.b32.xlu0 %v1167, 104
        %v1212 = vpop.permute.xlu0 %1211
        %1215 = vrot.lane.b32.xlu0 %v1201, 120
        %v1216 = vpop.permute.xlu0 %1215
        %1217 = vrot.lane.b32.xlu0 %v1204, 120
        %v1218 = vpop.permute.xlu0 %1217
        %1219 = vrot.lane.b32.xlu0 %v1201, 112
        %v1220 = vpop.permute.xlu0 %1219
        %1221 = vrot.lane.b32.xlu0 %v1204, 112
        %v1222 = vpop.permute.xlu0 %1221
        %1223 = vrot.lane.b32.xlu0 %v1201, 104
        %v1224 = vpop.permute.xlu0 %1223
        %1225 = vrot.lane.b32.xlu0 %v1204, 104
        %v1226 = vpop.permute.xlu0 %1225
        %v1227 = vsel %vm743, %v1167, 0
        %v1229 = vsel %vm743, %v1201, 0
        %v1231 = vsel %vm743, %v1204, 0
        %1233 = vmatpush.xpose.msra.mxu0 0.0
        %1234 = vmatpush.xpose.msra.mxu0 0.0
        %1235 = vmatpush.xpose.msra.mxu0 0.0
        %1236 = vmatpush.xpose.msra.mxu0 0.0
        %1237 = vmatpush.xpose.msra.mxu0 0.0
        %1238 = vmatpush.xpose.msra.mxu0 0.0
        %1239 = vmatpush.xpose.msra.mxu0 0.0
        %1240 = vmatpush.xpose.msra.mxu0 0.0
        %1241 = vmatpush.xpose.msra.mxu0 0.0
        %1242 = vmatpush.xpose.msra.mxu0 0.0
        %1243 = vmatpush.xpose.msra.mxu0 0.0
        %1244 = vmatpush.xpose.msra.mxu0 0.0
        %1245 = vmatpush.xpose.msra.mxu0 0.0
        %1246 = vmatpush.xpose.msra.mxu0 0.0
        %1247 = vmatpush.xpose.msra.mxu0 %v1231
        %1248 = vmatpush.xpose.msra.mxu0 %v1229
        %1249 = vmatmul.f32.gmra.mxu0 %v1227
        %v1250 = vpop.f32.mrf.mxu0
        %v1251 = vadd.f32 0.0, %v1250
        %1252 = vdwg.mxu0
        %v1253 = vsel %vm743, %v1208, 0
        %v1255 = vsel %vm743, %v1216, 0
        %v1257 = vsel %vm743, %v1218, 0
        %1259 = vmatpush.xpose.msra.mxu0 0.0
        %1260 = vmatpush.xpose.msra.mxu0 0.0
        %1261 = vmatpush.xpose.msra.mxu0 0.0
        %1262 = vmatpush.xpose.msra.mxu0 0.0
        %1263 = vmatpush.xpose.msra.mxu0 0.0
        %1264 = vmatpush.xpose.msra.mxu0 0.0
        %1265 = vmatpush.xpose.msra.mxu0 0.0
        %1266 = vmatpush.xpose.msra.mxu0 0.0
        %1267 = vmatpush.xpose.msra.mxu0 0.0
        %1268 = vmatpush.xpose.msra.mxu0 0.0
        %1269 = vmatpush.xpose.msra.mxu0 0.0
        %1270 = vmatpush.xpose.msra.mxu0 0.0
        %1271 = vmatpush.xpose.msra.mxu0 0.0
        %1272 = vmatpush.xpose.msra.mxu0 0.0
        %1273 = vmatpush.xpose.msra.mxu0 %v1257
        %1274 = vmatpush.xpose.msra.mxu0 %v1255
        %1275 = vmatmul.f32.gmra.mxu0 %v1253
        %v1276 = vpop.f32.mrf.mxu0
        %v1277 = vadd.f32 0.0, %v1276
        %1278 = vdwg.mxu0
        %v1279 = vsel %vm743, %v1210, 0
        %v1281 = vsel %vm743, %v1220, 0
        %v1283 = vsel %vm743, %v1222, 0
        %1285 = vmatpush.xpose.msra.mxu0 0.0
        %1286 = vmatpush.xpose.msra.mxu0 0.0
        %1287 = vmatpush.xpose.msra.mxu0 0.0
        %1288 = vmatpush.xpose.msra.mxu0 0.0
        %1289 = vmatpush.xpose.msra.mxu0 0.0
        %1290 = vmatpush.xpose.msra.mxu0 0.0
        %1291 = vmatpush.xpose.msra.mxu0 0.0
        %1292 = vmatpush.xpose.msra.mxu0 0.0
        %1293 = vmatpush.xpose.msra.mxu0 0.0
        %1294 = vmatpush.xpose.msra.mxu0 0.0
        %1295 = vmatpush.xpose.msra.mxu0 0.0
        %1296 = vmatpush.xpose.msra.mxu0 0.0
        %1297 = vmatpush.xpose.msra.mxu0 0.0
        %1298 = vmatpush.xpose.msra.mxu0 0.0
        %1299 = vmatpush.xpose.msra.mxu0 %v1283
        %1300 = vmatpush.xpose.msra.mxu0 %v1281
        %1301 = vmatmul.f32.gmra.mxu0 %v1279
        %v1302 = vpop.f32.mrf.mxu0
        %v1303 = vadd.f32 0.0, %v1302
        %1304 = vdwg.mxu0
        %v1305 = vsel %vm743, %v1212, 0
        %v1307 = vsel %vm743, %v1224, 0
        %v1309 = vsel %vm743, %v1226, 0
        %1311 = vmatpush.xpose.msra.mxu0 0.0
        %1312 = vmatpush.xpose.msra.mxu0 0.0
        %1313 = vmatpush.xpose.msra.mxu0 0.0
        %1314 = vmatpush.xpose.msra.mxu0 0.0
        %1315 = vmatpush.xpose.msra.mxu0 0.0
        %1316 = vmatpush.xpose.msra.mxu0 0.0
        %1317 = vmatpush.xpose.msra.mxu0 0.0
        %1318 = vmatpush.xpose.msra.mxu0 0.0
        %1319 = vmatpush.xpose.msra.mxu0 0.0
        %1320 = vmatpush.xpose.msra.mxu0 0.0
        %1321 = vmatpush.xpose.msra.mxu0 0.0
        %1322 = vmatpush.xpose.msra.mxu0 0.0
        %1323 = vmatpush.xpose.msra.mxu0 0.0
        %1324 = vmatpush.xpose.msra.mxu0 0.0
        %1325 = vmatpush.xpose.msra.mxu0 %v1309
        %1326 = vmatpush.xpose.msra.mxu0 %v1307
        %1327 = vmatmul.f32.gmra.mxu0 %v1305
        %v1328 = vpop.f32.mrf.mxu0
        %v1329 = vadd.f32 0.0, %v1328
        %1330 = vdwg.mxu0
        %v1331 = vmul.f32 %v1251, 0.35355338
        %v1332 = vmul.f32 %v1277, 0.35355338
        %v1333 = vmul.f32 %v1303, 0.35355338
        %v1334 = vmul.f32 %v1329, 0.35355338
        %v1335 = vsel %vm1063, %v1331, -inf
        %1336 = vmax.xlane.f32.xlu0 %v1335
        %v1337 = vpop.xlane.xlu0 %1336
        %v1338 = vsel %vm1063, %v1332, -inf
        %1339 = vmax.xlane.f32.xlu0 %v1338
        %v1340 = vpop.xlane.xlu0 %1339
        %v1341 = vsel %vm1063, %v1333, -inf
        %1342 = vmax.xlane.f32.xlu0 %v1341
        %v1343 = vpop.xlane.xlu0 %1342
        %v1344 = vsel %vm1063, %v1334, -inf
        %1345 = vmax.xlane.f32.xlu0 %v1344
        %v1346 = vpop.xlane.xlu0 %1345
        %v1347 = vsub.f32 %v1331, %v1337
        %v1348 = vsub.f32 %v1332, %v1340
        %v1349 = vsub.f32 %v1333, %v1343
        %v1350 = vsub.f32 %v1334, %v1346
        %v1351 = vmul.f32 %v1347, 1.442695
        %v1352 = vpow.pop %v1351
        %v1353 = vmul.f32 %v1348, 1.442695
        %v1354 = vpow.pop %v1353
        %v1355 = vmul.f32 %v1349, 1.442695
        %v1356 = vpow.pop %v1355
        %v1357 = vmul.f32 %v1350, 1.442695
        %v1358 = vpow.pop %v1357
        %v1359 = vsel %vm1063, %v1352, 0.0
        %1360 = vadd.xlane.f32.xlu0 %v1359
        %v1361 = vpop.xlane.xlu0 %1360
        %v1362 = vsel %vm1063, %v1354, 0.0
        %1363 = vadd.xlane.f32.xlu0 %v1362
        %v1364 = vpop.xlane.xlu0 %1363
        %v1365 = vsel %vm1063, %v1356, 0.0
        %1366 = vadd.xlane.f32.xlu0 %v1365
        %v1367 = vpop.xlane.xlu0 %1366
        %v1368 = vsel %vm1063, %v1358, 0.0
        %1369 = vadd.xlane.f32.xlu0 %v1368
        %v1370 = vpop.xlane.xlu0 %1369
        %v1371 = vrcp.pop %v1361
        %v1372 = vmul.f32 %v1361, %v1371
        %v1373 = vsub.f32 1.0, %v1372
        %v1374 = vmul.f32 %v1371, %v1373
        %v1375 = vadd.f32 %v1371, %v1374
        %vm1376 = vweird.f32 %v1361
        %vm1377 = vweird.f32 %v1371
        %vm1378 = vmor %vm1376, %vm1377
        %v1379 = vsel %vm1378, %v1371, %v1375
        %v1380 = vand.u32 2147483647, %v1361
        %vm1381 = vcmp.eq.f32.partialorder %v1380, 8.507059e+37
        %v1382 = vand.u32 %v1361, 2147483648
        %v1383 = vor.u32 1.1754944e-38, %v1382
        %v1384 = vsel %vm1381, %v1383, %v1379
        %v1385 = vmul.f32 %v1352, %v1384
        %v1386 = vrcp.pop %v1364
        %v1387 = vmul.f32 %v1364, %v1386
        %v1388 = vsub.f32 1.0, %v1387
        %v1389 = vmul.f32 %v1386, %v1388
        %v1390 = vadd.f32 %v1386, %v1389
        %vm1391 = vweird.f32 %v1364
        %vm1392 = vweird.f32 %v1386
        %vm1393 = vmor %vm1391, %vm1392
        %v1394 = vsel %vm1393, %v1386, %v1390
        %v1395 = vand.u32 2147483647, %v1364
        %vm1396 = vcmp.eq.f32.partialorder %v1395, 8.507059e+37
        %v1397 = vand.u32 %v1364, 2147483648
        %v1398 = vor.u32 1.1754944e-38, %v1397
        %v1399 = vsel %vm1396, %v1398, %v1394
        %v1400 = vmul.f32 %v1354, %v1399
        %v1401 = vrcp.pop %v1367
        %v1402 = vmul.f32 %v1367, %v1401
        %v1403 = vsub.f32 1.0, %v1402
        %v1404 = vmul.f32 %v1401, %v1403
        %v1405 = vadd.f32 %v1401, %v1404
        %vm1406 = vweird.f32 %v1367
        %vm1407 = vweird.f32 %v1401
        %vm1408 = vmor %vm1406, %vm1407
        %v1409 = vsel %vm1408, %v1401, %v1405
        %v1410 = vand.u32 2147483647, %v1367
        %vm1411 = vcmp.eq.f32.partialorder %v1410, 8.507059e+37
        %v1412 = vand.u32 %v1367, 2147483648
        %v1413 = vor.u32 1.1754944e-38, %v1412
        %v1414 = vsel %vm1411, %v1413, %v1409
        %v1415 = vmul.f32 %v1356, %v1414
        %v1416 = vrcp.pop %v1370
        %v1417 = vmul.f32 %v1370, %v1416
        %v1418 = vsub.f32 1.0, %v1417
        %v1419 = vmul.f32 %v1416, %v1418
        %v1420 = vadd.f32 %v1416, %v1419
        %vm1421 = vweird.f32 %v1370
        %vm1422 = vweird.f32 %v1416
        %vm1423 = vmor %vm1421, %vm1422
        %v1424 = vsel %vm1423, %v1416, %v1420
        %v1425 = vand.u32 2147483647, %v1370
        %vm1426 = vcmp.eq.f32.partialorder %v1425, 8.507059e+37
        %v1427 = vand.u32 %v1370, 2147483648
        %v1428 = vor.u32 1.1754944e-38, %v1427
        %v1429 = vsel %vm1426, %v1428, %v1424
        %v1430 = vmul.f32 %v1358, %v1429
        %1431 = vrot.lane.b32.xlu0 %v1201, 96
        %v1432 = vpop.permute.xlu0 %1431
        %1433 = vrot.lane.b32.xlu0 %v1204, 96
        %v1434 = vpop.permute.xlu0 %1433
        %v1438 = vsel %vm1063, %v1385, 0
        %1440 = vmatpush.msra.mxu0 0.0
        %1441 = vmatpush.msra.mxu0 0.0
        %1442 = vmatpush.msra.mxu0 0.0
        %1443 = vmatpush.msra.mxu0 0.0
        %1444 = vmatpush.msra.mxu0 0.0
        %1445 = vmatpush.msra.mxu0 0.0
        %1446 = vmatpush.msra.mxu0 0.0
        %1447 = vmatpush.msra.mxu0 0.0
        %1448 = vmatpush.msra.mxu0 0.0
        %1449 = vmatpush.msra.mxu0 0.0
        %1450 = vmatpush.msra.mxu0 0.0
        %1451 = vmatpush.msra.mxu0 0.0
        %1452 = vmatpush.msra.mxu0 0.0
        %1453 = vmatpush.msra.mxu0 0.0
        %1454 = vmatpush.msra.mxu0 %v1434
        %1455 = vmatpush.msra.mxu0 %v1432
        %1456 = vmatmul.f32.gmra.mxu0 %v1438
        %v1457 = vpop.f32.mrf.mxu0
        %v1458 = vadd.f32 0.0, %v1457
        %1459 = vdwg.mxu0
        %1460 = vrot.lane.b32.xlu0 %v1216, 96
        %v1461 = vpop.permute.xlu0 %1460
        %1462 = vrot.lane.b32.xlu0 %v1218, 96
        %v1463 = vpop.permute.xlu0 %1462
        %v1467 = vsel %vm1063, %v1400, 0
        %1469 = vmatpush.msra.mxu0 0.0
        %1470 = vmatpush.msra.mxu0 0.0
        %1471 = vmatpush.msra.mxu0 0.0
        %1472 = vmatpush.msra.mxu0 0.0
        %1473 = vmatpush.msra.mxu0 0.0
        %1474 = vmatpush.msra.mxu0 0.0
        %1475 = vmatpush.msra.mxu0 0.0
        %1476 = vmatpush.msra.mxu0 0.0
        %1477 = vmatpush.msra.mxu0 0.0
        %1478 = vmatpush.msra.mxu0 0.0
        %1479 = vmatpush.msra.mxu0 0.0
        %1480 = vmatpush.msra.mxu0 0.0
        %1481 = vmatpush.msra.mxu0 0.0
        %1482 = vmatpush.msra.mxu0 0.0
        %1483 = vmatpush.msra.mxu0 %v1463
        %1484 = vmatpush.msra.mxu0 %v1461
        %1485 = vmatmul.f32.gmra.mxu0 %v1467
        %v1486 = vpop.f32.mrf.mxu0
        %v1487 = vadd.f32 0.0, %v1486
        %1488 = vdwg.mxu0
        %1489 = vrot.lane.b32.xlu0 %v1220, 96
        %v1490 = vpop.permute.xlu0 %1489
        %1491 = vrot.lane.b32.xlu0 %v1222, 96
        %v1492 = vpop.permute.xlu0 %1491
        %v1496 = vsel %vm1063, %v1415, 0
        %1498 = vmatpush.msra.mxu0 0.0
        %1499 = vmatpush.msra.mxu0 0.0
        %1500 = vmatpush.msra.mxu0 0.0
        %1501 = vmatpush.msra.mxu0 0.0
        %1502 = vmatpush.msra.mxu0 0.0
        %1503 = vmatpush.msra.mxu0 0.0
        %1504 = vmatpush.msra.mxu0 0.0
        %1505 = vmatpush.msra.mxu0 0.0
        %1506 = vmatpush.msra.mxu0 0.0
        %1507 = vmatpush.msra.mxu0 0.0
        %1508 = vmatpush.msra.mxu0 0.0
        %1509 = vmatpush.msra.mxu0 0.0
        %1510 = vmatpush.msra.mxu0 0.0
        %1511 = vmatpush.msra.mxu0 0.0
        %1512 = vmatpush.msra.mxu0 %v1492
        %1513 = vmatpush.msra.mxu0 %v1490
        %1514 = vmatmul.f32.gmra.mxu0 %v1496
        %v1515 = vpop.f32.mrf.mxu0
        %v1516 = vadd.f32 0.0, %v1515
        %1517 = vdwg.mxu0
        %1518 = vrot.lane.b32.xlu0 %v1224, 96
        %v1519 = vpop.permute.xlu0 %1518
        %1520 = vrot.lane.b32.xlu0 %v1226, 96
        %v1521 = vpop.permute.xlu0 %1520
        %v1525 = vsel %vm1063, %v1430, 0
        %1527 = vmatpush.msra.mxu0 0.0
        %1528 = vmatpush.msra.mxu0 0.0
        %1529 = vmatpush.msra.mxu0 0.0
        %1530 = vmatpush.msra.mxu0 0.0
        %1531 = vmatpush.msra.mxu0 0.0
        %1532 = vmatpush.msra.mxu0 0.0
        %1533 = vmatpush.msra.mxu0 0.0
        %1534 = vmatpush.msra.mxu0 0.0
        %1535 = vmatpush.msra.mxu0 0.0
        %1536 = vmatpush.msra.mxu0 0.0
        %1537 = vmatpush.msra.mxu0 0.0
        %1538 = vmatpush.msra.mxu0 0.0
        %1539 = vmatpush.msra.mxu0 0.0
        %1540 = vmatpush.msra.mxu0 0.0
        %1541 = vmatpush.msra.mxu0 %v1521
        %1542 = vmatpush.msra.mxu0 %v1519
        %1543 = vmatmul.f32.gmra.mxu0 %v1525
        %v1544 = vpop.f32.mrf.mxu0
        %v1545 = vadd.f32 0.0, %v1544
        %1546 = vdwg.mxu0
        %1548 = vrot.lane.b32.xlu0 %v1487, 8
        %v1549 = vpop.permute.xlu0 %1548
        %1552 = vrot.lane.b32.xlu0 %v1516, 16
        %v1553 = vpop.permute.xlu0 %1552
        %1556 = vrot.lane.b32.xlu0 %v1545, 24
        %v1557 = vpop.permute.xlu0 %1556
        %v1559 = vsel %vm743, %v1458, %v1549
        %v1560 = vsel %vm1063, %v1559, %v1553
        %v1561 = vsel %vm1065, %v1560, %v1557
        %v1562 = vld [vmem:[%s12] sm:$0xff]
        %v1563 = vld [vmem:[%s12 + $0x8] sm:$0xff]
        %v1564 = vld [vmem:[%s12 + $0x10] sm:$0xff]
        %v1565 = vld [vmem:[%s12 + $0x18] sm:$0xff]
        %v1566 = vld [vmem:[%s13] sm:$0x1]
        %v1568 = vperm.slane %v1566, 0
        %v1571 = vsel %vm710, %v1561, 0
        %1573 = vmatpush.msra.mxu0 0.0
        %1574 = vmatpush.msra.mxu0 0.0
        %1575 = vmatpush.msra.mxu0 0.0
        %1576 = vmatpush.msra.mxu0 0.0
        %1577 = vmatpush.msra.mxu0 0.0
        %1578 = vmatpush.msra.mxu0 0.0
        %1579 = vmatpush.msra.mxu0 0.0
        %1580 = vmatpush.msra.mxu0 0.0
        %1581 = vmatpush.msra.mxu0 0.0
        %1582 = vmatpush.msra.mxu0 0.0
        %1583 = vmatpush.msra.mxu0 0.0
        %1584 = vmatpush.msra.mxu0 0.0
        %1585 = vmatpush.msra.mxu0 %v1565
        %1586 = vmatpush.msra.mxu0 %v1564
        %1587 = vmatpush.msra.mxu0 %v1563
        %1588 = vmatpush.msra.mxu0 %v1562
        %1589 = vmatmul.f32.gmra.mxu0 %v1571
        %v1590 = vpop.f32.mrf.mxu0
        %v1591 = vadd.f32 %v1568, %v1590
        %1592 = vdwg.mxu0
        %v1593 = vadd.f32 %v1591, %v1137
        %v1594 = vld [vmem:[%s14] sm:$0x1]
        %v1595 = vld [vmem:[%s15] sm:$0x1]
        %v1596 = vsel %vm710, %v1593, 0.0
        %1597 = vadd.xlane.f32.xlu0 %v1596
        %v1598 = vpop.xlane.xlu0 %1597
        %v1599 = vmul.f32 %v1598, %v1110
        %v1600 = vsub.f32 %v1593, %v1599
        %v1601 = vmul.f32 %v1600, %v1600
        %v1602 = vsel %vm710, %v1601, 0.0
        %1603 = vadd.xlane.f32.xlu0 %v1602
        %v1604 = vpop.xlane.xlu0 %1603
        %v1605 = vmul.f32 %v1604, %v1110
        %v1606 = vadd.f32 %v1605, 1e-05
        %v1607 = vrsqrt.pop %v1606
        %v1608 = vmul.f32 %v1607, %v1606
        %v1609 = vmul.f32 %v1608, %v1607
        %v1610 = vmul.f32 0.5, %v1609
        %v1611 = vsub.f32 1.5, %v1610
        %v1612 = vmul.f32 %v1607, %v1611
        %vm1613 = vweird.f32 %v1606
        %vm1614 = vweird.f32 %v1607
        %vm1615 = vmor %vm1613, %vm1614
        %v1616 = vsel %vm1615, %v1607, %v1612
        %v1617 = vmul.f32 %v1600, %v1616
        %v1619 = vperm.slane %v1594, 0
        %v1621 = vmul.f32 %v1617, %v1619
        %v1623 = vperm.slane %v1595, 0
        %v1625 = vadd.f32 %v1621, %v1623
        %v1626 = vld [vmem:[%s16] sm:$0xff]
        %v1627 = vld [vmem:[%s16 + $0x8] sm:$0xff]
        %v1628 = vld [vmem:[%s16 + $0x10] sm:$0xff]
        %v1629 = vld [vmem:[%s16 + $0x18] sm:$0xff]
        %v1630 = vld [vmem:[%s17] sm:$0x1]
        %v1632 = vperm.slane %v1630, 0
        %v1635 = vsel %vm710, %v1625, 0
        %1637 = vmatpush.msra.mxu0 0.0
        %1638 = vmatpush.msra.mxu0 0.0
        %1639 = vmatpush.msra.mxu0 0.0
        %1640 = vmatpush.msra.mxu0 0.0
        %1641 = vmatpush.msra.mxu0 0.0
        %1642 = vmatpush.msra.mxu0 0.0
        %1643 = vmatpush.msra.mxu0 0.0
        %1644 = vmatpush.msra.mxu0 0.0
        %1645 = vmatpush.msra.mxu0 0.0
        %1646 = vmatpush.msra.mxu0 0.0
        %1647 = vmatpush.msra.mxu0 0.0
        %1648 = vmatpush.msra.mxu0 0.0
        %1649 = vmatpush.msra.mxu0 %v1629
        %1650 = vmatpush.msra.mxu0 %v1628
        %1651 = vmatpush.msra.mxu0 %v1627
        %1652 = vmatpush.msra.mxu0 %v1626
        %1653 = vmatmul.f32.gmra.mxu0 %v1635
        %v1654 = vpop.f32.mrf.mxu0
        %v1655 = vadd.f32 %v1632, %v1654
        %1656 = vdwg.mxu0
        %v1657 = vmax.f32 %v1655, 0.0
        %v1658 = vld [vmem:[%s18] sm:$0xff]
        %v1659 = vld [vmem:[%s18 + $0x8] sm:$0xff]
        %v1660 = vld [vmem:[%s18 + $0x10] sm:$0xff]
        %v1661 = vld [vmem:[%s18 + $0x18] sm:$0xff]
        %v1662 = vld [vmem:[%s18 + $0x20] sm:$0xff]
        %v1663 = vld [vmem:[%s18 + $0x28] sm:$0xff]
        %v1664 = vld [vmem:[%s18 + $0x30] sm:$0xff]
        %v1665 = vld [vmem:[%s18 + $0x38] sm:$0xff]
        %v1666 = vld [vmem:[%s18 + $0x40] sm:$0xff]
        %v1667 = vld [vmem:[%s18 + $0x48] sm:$0xff]
        %v1668 = vld [vmem:[%s18 + $0x50] sm:$0xff]
        %v1669 = vld [vmem:[%s18 + $0x58] sm:$0xff]
        %v1670 = vld [vmem:[%s18 + $0x60] sm:$0xff]
        %v1671 = vld [vmem:[%s18 + $0x68] sm:$0xff]
        %v1672 = vld [vmem:[%s18 + $0x70] sm:$0xff]
        %v1673 = vld [vmem:[%s18 + $0x78] sm:$0xff]
        %v1674 = vld [vmem:[%s19] sm:$0x1]
        %v1676 = vperm.slane %v1674, 0
        %1678 = vmatpush.msra.mxu0 %v1673
        %1679 = vmatpush.msra.mxu0 %v1672
        %1680 = vmatpush.msra.mxu0 %v1671
        %1681 = vmatpush.msra.mxu0 %v1670
        %1682 = vmatpush.msra.mxu0 %v1669
        %1683 = vmatpush.msra.mxu0 %v1668
        %1684 = vmatpush.msra.mxu0 %v1667
        %1685 = vmatpush.msra.mxu0 %v1666
        %1686 = vmatpush.msra.mxu0 %v1665
        %1687 = vmatpush.msra.mxu0 %v1664
        %1688 = vmatpush.msra.mxu0 %v1663
        %1689 = vmatpush.msra.mxu0 %v1662
        %1690 = vmatpush.msra.mxu0 %v1661
        %1691 = vmatpush.msra.mxu0 %v1660
        %1692 = vmatpush.msra.mxu0 %v1659
        %1693 = vmatpush.msra.mxu0 %v1658
        %1694 = vmatmul.f32.gmra.mxu0 %v1657
        %v1695 = vpop.f32.mrf.mxu0
        %v1696 = vadd.f32 %v1676, %v1695
        %1697 = vdwg.mxu0
        %v1698 = vadd.f32 %v1696, %v1625
        %v1699 = vld [vmem:[%s20] sm:$0x1]
        %v1700 = vld [vmem:[%s21] sm:$0x1]
        %v1701 = vsel %vm710, %v1698, 0.0
        %1702 = vadd.xlane.f32.xlu0 %v1701
        %v1703 = vpop.xlane.xlu0 %1702
        %v1704 = vmul.f32 %v1703, %v1110
        %v1705 = vsub.f32 %v1698, %v1704
        %v1706 = vmul.f32 %v1705, %v1705
        %v1707 = vsel %vm710, %v1706, 0.0
        %1708 = vadd.xlane.f32.xlu0 %v1707
        %v1709 = vpop.xlane.xlu0 %1708
        %v1710 = vmul.f32 %v1709, %v1110
        %v1711 = vadd.f32 %v1710, 1e-05
        %v1712 = vrsqrt.pop %v1711
        %v1713 = vmul.f32 %v1712, %v1711
        %v1714 = vmul.f32 %v1713, %v1712
        %v1715 = vmul.f32 0.5, %v1714
        %v1716 = vsub.f32 1.5, %v1715
        %v1717 = vmul.f32 %v1712, %v1716
        %vm1718 = vweird.f32 %v1711
        %vm1719 = vweird.f32 %v1712
        %vm1720 = vmor %vm1718, %vm1719
        %v1721 = vsel %vm1720, %v1712, %v1717
        %v1722 = vmul.f32 %v1705, %v1721
        %v1724 = vperm.slane %v1699, 0
        %v1726 = vmul.f32 %v1722, %v1724
        %v1728 = vperm.slane %v1700, 0
        %v1730 = vadd.f32 %v1726, %v1728
        %1731 = vst.msk [vmem:[%s689] sm:$0xff] %vm710, %v1730
        %s1732 = sand.u32 %s516, 1
        %s1733 = scalar_lea.sflag [#allocation3], %s1732
        %s1734 = sand.u32 %s516, 1
        %s1735 = smul.addr %s1734, 8
        %s1736 = scalar_lea.vmem [#allocation2], %s1735
        // Predicated region
        $region109: #{transformer_decoder_layer.1} parent=107 // pred_check
          %p1737 = pneg %p526
        $region110: #{transformer_decoder_layer.1} parent=107 // pred_check_branch
          %1739 = sbr.rel (%p1737) target = $region112
        $region111: #{transformer_decoder_layer.1} parent=107 // pred_region
          %1741 = vsyncadd %s1733, 0
          %s1742 = smul.addr %s36, 8
          %s1743 = scalar_lea.hbm %s22, %s1742
          %s1745 = sshll.u32 %s1736, 4
          %s1746 = int_to_ptr.vmem [resolvable:$true] %s1745
          %s1747 = sshll.u32 %s1743, 4
          %s1748 = int_to_ptr.hbm [resolvable:$true] %s1747
          %1750 = dma.vmem_to_hbm [thread:$0]  %s1746, 128, %s1748, %s1733
        $region112: #{transformer_decoder_layer.1} parent=107 // pred_fallthru
          _
      $region108: #{transformer_decoder_layer.1} parent=5 // pred_fallthru
        _
      %p1751 = scmp.le.s32.totalorder 2, %s31
      // Predicated region
      $region113: #{transformer_decoder_layer.1} parent=5 // pred_check
        %p1752 = pneg %p1751
      $region114: #{transformer_decoder_layer.1} parent=5 // pred_check_branch
        %1754 = sbr.rel (%p1752) target = $region116
      $region115: #{transformer_decoder_layer.1} parent=5 // pred_region
        %s1755 = ssub.s32 %s31, 2
        // Predicated region
        $region117: #{transformer_decoder_layer.1} parent=115 // pred_check
          %p1756 = pneg %p532
        $region118: #{transformer_decoder_layer.1} parent=115 // pred_check_branch
          %1758 = sbr.rel (%p1756) target = $region120
        $region119: #{transformer_decoder_layer.1} parent=115 // pred_region
          %s1759 = sand.u32 %s517, 1
          %s1760 = scalar_lea.sflag [#allocation3], %s1759
          %s1761 = sand.u32 %s517, 1
          %s1762 = smul.addr %s1761, 8
          %s1763 = scalar_lea.vmem [#allocation2], %s1762
          %1765 = dma.done %s1760, 128
        $region120: #{transformer_decoder_layer.1} parent=115 // pred_fallthru
          _
      $region116: #{transformer_decoder_layer.1} parent=5 // pred_fallthru
        _
    $region6: #{transformer_decoder_layer.1} parent=1 // loop_footer
      %s35 = sadd.s32 1, %s31
    $region7: #{transformer_decoder_layer.1} parent=1 // loop_footer_branch
      %30 = sbr.rel target = $region3
    $region8: #{transformer_decoder_layer.1} parent=1 // loop_exit
      _
    %1766 = vsyncpa [#allocation3], 1
    %s1767 = scalar_lea.sflag [#allocation3], 1
    %1768 = vsyncpa %s1767, 1

</llo_original>
